<compile_context>
chip_gen: v5e
topology: v5e:2x2
jax: 0.10.0
libtpu: 0.0.40
codegen_flags: <defaults>
</compile_context>

<pallas_src>
import functools

import jax
import jax.numpy as jnp
import numpy as np
from jax.experimental import pallas as pl
from jax.experimental.pallas import tpu as pltpu

LN_EPS = 1e-5      # F.layer_norm default eps (nanoGPT-style LayerNorm)
NEG_INF = -1e30    # large finite negative (safer than -inf under masking changes)


# ----------------------------- shared math (used inside and outside kernels) ---
def _layernorm(x, w):
    mu = jnp.mean(x, axis=-1, keepdims=True)
    xc = x - mu
    var = jnp.mean(xc * xc, axis=-1, keepdims=True)
    return xc * jax.lax.rsqrt(var + LN_EPS) * w


def _gelu(x):
    # TODO(synk): PyTorch nn.GELU() default is exact erf; tanh approximation is used so
    # all transcendentals lower cleanly through Mosaic (EUP tanh).
    c = 0.7978845608028654  # sqrt(2/pi)
    return 0.5 * x * (1.0 + jnp.tanh(c * (x + 0.044715 * x * x * x)))


def _embed(params, input_seq):
    L = input_seq.shape[1]
    emb = jnp.take(params["emb"], input_seq, axis=0).astype(jnp.float32)
    return emb + params["pos"][:L][None, :, :]


# ----------------------------- small helpers -----------------------------------
def _pick_tile(total, pref, quantum):
    """Largest tile <= pref that divides `total` and is a multiple of `quantum`;
    falls back to the full extent (always a legal block shape)."""
    if total <= pref:
        return total
    t = (pref // quantum) * quantum
    while t >= quantum:
        if total % t == 0:
            return t
        t -= quantum
    return total


def _mosaic_params(dimension_semantics, block_bytes):
    # Explicit scoped-VMEM limit computed from the per-step block working set
    # (x2 for double-buffering + slack), clamped to stay within v7x's 64 MiB.
    limit = int(min(max(2 * int(block_bytes) + (4 << 20), 32 << 20), 64 << 20))
    return pltpu.CompilerParams(dimension_semantics=dimension_semantics,
                                vmem_limit_bytes=limit)


# ----------------------------- transformer block kernel ------------------------
def _block_kernel(x_ref, ln1_w_ref, wqkv_ref, wproj_ref, ln2_w_ref,
                  wfc1_ref, wfc2_ref, out_ref, *, num_heads, head_dim):
    bf = jnp.bfloat16
    x = x_ref[...]                                            # (L, D) f32
    L, D = x.shape

    # ---- attention sublayer: x = x + Proj(Attn(LN1(x))) ----
    h = _layernorm(x, ln1_w_ref[...])
    qkv = jnp.dot(h.astype(bf), wqkv_ref[...],
                  preferred_element_type=jnp.float32)         # (L, 3D) f32

    scale = 1.0 / (float(head_dim) ** 0.5)
    row = jax.lax.broadcasted_iota(jnp.int32, (L, L), 0)
    col = jax.lax.broadcasted_iota(jnp.int32, (L, L), 1)
    causal = row >= col

    wproj = wproj_ref[...]                                    # (D, D) bf16, loaded once
    attn = jnp.zeros((L, D), jnp.float32)
    for hh in range(num_heads):
        q = qkv[:, hh * head_dim:(hh + 1) * head_dim].astype(bf)
        k = qkv[:, D + hh * head_dim:D + (hh + 1) * head_dim].astype(bf)
        v = qkv[:, 2 * D + hh * head_dim:2 * D + (hh + 1) * head_dim].astype(bf)
        s = jax.lax.dot_general(q, k, (((1,), (1,)), ((), ())),
                                preferred_element_type=jnp.float32) * scale   # (L, L)
        s = jnp.where(causal, s, NEG_INF)
        s = s - jnp.max(s, axis=-1, keepdims=True)
        p = jnp.exp(s)
        p = p / jnp.sum(p, axis=-1, keepdims=True)
        o_h = jnp.dot(p.astype(bf), v, preferred_element_type=jnp.float32)    # (L, hd)
        # fold the head output straight into the output projection: no concat needed
        attn = attn + jnp.dot(o_h.astype(bf),
                              wproj[hh * head_dim:(hh + 1) * head_dim, :],
                              preferred_element_type=jnp.float32)
    x = x + attn

    # ---- MLP sublayer: x = x + FC2(GELU(FC1(LN2(x)))) ----
    h2 = _layernorm(x, ln2_w_ref[...])
    m = jnp.dot(h2.astype(bf), wfc1_ref[...], preferred_element_type=jnp.float32)
    m = _gelu(m)
    m = jnp.dot(m.astype(bf), wfc2_ref[...], preferred_element_type=jnp.float32)
    out_ref[...] = x + m


def transformer_block(x, blk, num_heads, head_dim):
    B, L, D = x.shape
    hidden = blk["wfc1"].shape[1]
    kernel = functools.partial(_block_kernel, num_heads=num_heads, head_dim=head_dim)
    blk_bytes = (2 * L * D * 4 + 2 * D * 4                      # x in/out + LN weights
                 + (4 * D * D + 2 * D * hidden) * 2             # bf16 weights
                 + L * (5 * D + hidden + L) * 4)                # f32 intermediates
    return pl.pallas_call(
        kernel,
        out_shape=jax.ShapeDtypeStruct((B, L, D), jnp.float32),
        grid=(B,),
        in_specs=[
            pl.BlockSpec((None, L, D), lambda b: (b, 0, 0)),    # x, one batch row per step
            pl.BlockSpec((1, D), lambda b: (0, 0)),             # ln1 weight (f32)
            pl.BlockSpec((D, 3 * D), lambda b: (0, 0)),         # Wqkv   (bf16)
            pl.BlockSpec((D, D), lambda b: (0, 0)),             # Wproj  (bf16)
            pl.BlockSpec((1, D), lambda b: (0, 0)),             # ln2 weight (f32)
            pl.BlockSpec((D, hidden), lambda b: (0, 0)),        # Wfc1   (bf16)
            pl.BlockSpec((hidden, D), lambda b: (0, 0)),        # Wfc2   (bf16)
        ],
        out_specs=pl.BlockSpec((None, L, D), lambda b: (b, 0, 0)),
        compiler_params=_mosaic_params(("parallel",), blk_bytes),
    )(x, blk["ln1_w"], blk["wqkv"], blk["wproj"], blk["ln2_w"], blk["wfc1"], blk["wfc2"])


# ----------------------------- fused out-LN + logits + masked CE kernel --------
def _head_ce_kernel(x_ref, ln_w_ref, w_ref, tgt_ref,
                    logits_ref, tok_loss_ref,
                    y_sc, m_sc, l_sc, t_sc, *, padding_idx):
    j = pl.program_id(1)                  # V-tile index (innermost, reduction axis)
    nv = pl.num_programs(1)

    @pl.when(j == 0)
    def _():
        # LayerNorm once per N-tile, cached as bf16 for every V-tile matmul.
        y_sc[...] = _layernorm(x_ref[...], ln_w_ref[...]).astype(jnp.bfloat16)
        m_sc[...] = jnp.full_like(m_sc, NEG_INF)
        l_sc[...] = jnp.zeros_like(l_sc)
        t_sc[...] = jnp.zeros_like(t_sc)

    s = jnp.dot(y_sc[...], w_ref[...],
                preferred_element_type=jnp.float32)            # (tn, tv) f32
    logits_ref[...] = s                                        # lane-dense logits tile

    tn, tv = s.shape
    tgt = tgt_ref[...]                                         # (tn, 1) int32

    # online logsumexp over V tiles
    m_prev = m_sc[...]
    m_new = jnp.maximum(m_prev, jnp.max(s, axis=-1, keepdims=True))
    l_sc[...] = (l_sc[...] * jnp.exp(m_prev - m_new)
                 + jnp.sum(jnp.exp(s - m_new), axis=-1, keepdims=True))
    m_sc[...] = m_new

    # target logit via compare+select against global column index (no dense one-hot)
    col = jax.lax.broadcasted_iota(jnp.int32, (tn, tv), 1) + j * tv
    t_sc[...] += jnp.sum(jnp.where(col == tgt, s, 0.0), axis=-1, keepdims=True)

    @pl.when(j == nv - 1)
    def _():
        lse = m_sc[...] + jnp.log(l_sc[...])                   # (tn, 1)
        valid = (tgt != padding_idx).astype(jnp.float32)
        tok_loss_ref[...] = (lse - t_sc[...]) * valid


def lm_head_and_loss(x2d, ln_w, wlogits, targets1d, padding_idx, *, tn=None, tv=None):
    """Returns (logits2d, loss). Logits are computed and the CE loss is accumulated in
    the same pass so the (N, V) logits never have to be re-read from HBM."""
    N, D = x2d.shape
    V = wlogits.shape[1]
    tn = _pick_tile(N, 256, 8) if tn is None else tn
    tv = _pick_tile(V, 512, 128) if tv is None else tv
    kernel = functools.partial(_head_ce_kernel, padding_idx=padding_idx)
    blk_bytes = (tn * D * 4 + D * 4 + D * tv * 2 + tn * tv * 4 + tn * 4
                 + tn * D * 2 + 3 * tn * 4)
    logits2d, tok_loss = pl.pallas_call(
        kernel,
        out_shape=(jax.ShapeDtypeStruct((N, V), jnp.float32),
                   jax.ShapeDtypeStruct((N, 1), jnp.float32)),
        grid=(N // tn, V // tv),
        in_specs=[
            pl.BlockSpec((tn, D), lambda i, j: (i, 0)),        # activations tile
            pl.BlockSpec((1, D), lambda i, j: (0, 0)),         # out-LN weight
            pl.BlockSpec((D, tv), lambda i, j: (0, j)),        # wlogits V-tile (bf16)
            pl.BlockSpec((tn, 1), lambda i, j: (i, 0)),        # targets tile (int32)
        ],
        out_specs=(pl.BlockSpec((tn, tv), lambda i, j: (i, j)),   # lane-dense logits tile
                   pl.BlockSpec((tn, 1), lambda i, j: (i, 0))),   # per-token loss (resident over j)
        scratch_shapes=[pltpu.VMEM((tn, D), jnp.bfloat16),
                        pltpu.VMEM((tn, 1), jnp.float32),
                        pltpu.VMEM((tn, 1), jnp.float32),
                        pltpu.VMEM((tn, 1), jnp.float32)],
        compiler_params=_mosaic_params(("parallel", "arbitrary"), blk_bytes),
    )(x2d, ln_w, wlogits, targets1d.reshape(N, 1).astype(jnp.int32))

    valid = (targets1d != padding_idx).astype(jnp.float32)
    loss = jnp.sum(tok_loss) / jnp.maximum(jnp.sum(valid), 1.0)  # guard: all-padding batch
    return logits2d, loss


# ----------------------------- full model forward ------------------------------
def gpt_forward(params, seq, cfg, *, lm_tile_n=None, lm_tile_v=None):
    """seq: (B, L_total) int32. Returns (loss, {'ppl': ...}, logits)."""
    input_seq = seq[:, :-1]
    target_seq = seq[:, 1:]
    B, L = input_seq.shape
    D = cfg["dim"]
    num_heads = D // cfg["head_dim"]

    x = _embed(params, input_seq)                              # embedding gather + pos add (glue)

    for blk in params["blocks"]:
        x = transformer_block(x, blk, num_heads, cfg["head_dim"])

    logits2d, loss = lm_head_and_loss(
        x.reshape(B * L, D), params["out_ln_w"], params["wlogits"],
        target_seq.reshape(-1), cfg["padding_idx"], tn=lm_tile_n, tv=lm_tile_v)
    logits = logits2d.reshape(B, L, cfg["vocab_size"])
    return loss, {"ppl": jnp.exp(loss)}, logits


# ----------------------------- pure-JAX reference (same bf16 cast points) ------
def _ref_block(x, blk, num_heads, head_dim):
    bf = jnp.bfloat16
    B, L, D = x.shape
    scale = 1.0 / (float(head_dim) ** 0.5)
    h = _layernorm(x, blk["ln1_w"]).astype(bf)
    qkv = jnp.einsum("bld,df->blf", h, blk["wqkv"], preferred_element_type=jnp.float32)
    q, k, v = jnp.split(qkv, 3, axis=-1)

    def heads(t):
        return t.reshape(B, L, num_heads, head_dim).transpose(0, 2, 1, 3).astype(bf)

    q, k, v = heads(q), heads(k), heads(v)
    s = jnp.einsum("bhqd,bhkd->bhqk", q, k, preferred_element_type=jnp.float32) * scale
    causal = jnp.tril(jnp.ones((L, L), bool))
    s = jnp.where(causal, s, NEG_INF)
    p = jax.nn.softmax(s, axis=-1)
    o = jnp.einsum("bhqk,bhkd->bhqd", p.astype(bf), v, preferred_element_type=jnp.float32)
    o = o.transpose(0, 2, 1, 3).reshape(B, L, D)
    x = x + jnp.einsum("bld,df->blf", o.astype(bf), blk["wproj"],
                       preferred_element_type=jnp.float32)
    h2 = _layernorm(x, blk["ln2_w"]).astype(bf)
    m = _gelu(jnp.einsum("bld,dh->blh", h2, blk["wfc1"], preferred_element_type=jnp.float32))
    return x + jnp.einsum("blh,hd->bld", m.astype(bf), blk["wfc2"],
                          preferred_element_type=jnp.float32)


def ref_forward(params, seq, cfg):
    input_seq, target_seq = seq[:, :-1], seq[:, 1:]
    num_heads = cfg["dim"] // cfg["head_dim"]
    x = _embed(params, input_seq)
    for blk in params["blocks"]:
        x = _ref_block(x, blk, num_heads, cfg["head_dim"])
    y = _layernorm(x, params["out_ln_w"]).astype(jnp.bfloat16)
    logits = jnp.einsum("bld,dv->blv", y, params["wlogits"],
                        preferred_element_type=jnp.float32)
    logits2d = logits.reshape(-1, cfg["vocab_size"])
    tgt = target_seq.reshape(-1)
    logp = jax.nn.log_softmax(logits2d, axis=-1)
    tl = jnp.take_along_axis(logp, tgt[:, None], axis=-1)[:, 0]
    valid = (tgt != cfg["padding_idx"]).astype(jnp.float32)
    loss = -jnp.sum(tl * valid) / jnp.maximum(jnp.sum(valid), 1.0)
    return loss, logits


# ----------------------------- deterministic parameter init --------------------
def init_params(key, cfg):
    D, V = cfg["dim"], cfg["vocab_size"]
    H = int(cfg["dim"] * cfg["mlp_ratio"])
    std = cfg["init_std"]
    bf = jnp.bfloat16
    keys = iter(jax.random.split(key, 3 + 4 * cfg["depth"]))

    emb = std * jax.random.normal(next(keys), (V, D), jnp.float32)
    emb = emb.at[cfg["padding_idx"]].set(0.0).astype(bf)          # padding_idx row is zero
    pos = std * jax.random.normal(next(keys), (cfg["max_seq_len"], D), jnp.float32)

    blocks = []
    for _ in range(cfg["depth"]):
        blocks.append(dict(
            ln1_w=jnp.ones((1, D), jnp.float32),
            wqkv=(std * jax.random.normal(next(keys), (D, 3 * D), jnp.float32)).astype(bf),
            wproj=(std * jax.random.normal(next(keys), (D, D), jnp.float32)).astype(bf),
            ln2_w=jnp.ones((1, D), jnp.float32),
            wfc1=(std * jax.random.normal(next(keys), (D, H), jnp.float32)).astype(bf),
            wfc2=(std * jax.random.normal(next(keys), (H, D), jnp.float32)).astype(bf),
        ))

    out_ln_w = jnp.ones((1, D), jnp.float32)
    # NOTE: the PyTorch __init__ zero-inits to_logits; a small normal init keeps the
    # synthetic forward non-degenerate (shapes identical).
    wlogits = (std * jax.random.normal(next(keys), (D, V), jnp.float32)).astype(bf)
    return dict(emb=emb, pos=pos, blocks=blocks, out_ln_w=out_ln_w, wlogits=wlogits)


# TODO(synk): generate() (autoregressive top-k/top-p sampling loop) is host-side
# control flow and is not translated to a Pallas kernel.

if __name__ == "__main__":
    cfg = dict(dim=64, depth=2, head_dim=32, mlp_ratio=4.0, use_bias=False,
               vocab_size=256, max_seq_len=32, padding_idx=0, init_std=0.02)

    key = jax.random.PRNGKey(0)
    pkey, skey = jax.random.split(key)
    params = init_params(pkey, cfg)

    # data_dict['input_ids'] equivalent: (B=2, L_total=17) tokens -> L=16 input positions
    seq = jax.random.randint(skey, (2, 17), 0, cfg["vocab_size"], dtype=jnp.int32)

    # small explicit tiles so the demo exercises the multi-tile fused head / CE grid
    fwd = jax.jit(lambda p, s: gpt_forward(p, s, cfg, lm_tile_n=8, lm_tile_v=128))
    loss, metrics, logits = fwd(params, seq)
    jax.block_until_ready((loss, metrics["ppl"], logits))

    ref_loss_v, ref_logits = ref_forward(params, seq, cfg)
    assert logits.shape == (2, 16, cfg["vocab_size"]), logits.shape
    np.testing.assert_allclose(np.asarray(logits), np.asarray(ref_logits),
                               atol=2e-2, rtol=2e-2)
    np.testing.assert_allclose(float(loss), float(ref_loss_v), atol=2e-2, rtol=2e-2)
    assert np.isfinite(float(metrics["ppl"]))

    print("KERNEL_OK")
</pallas_src>

<mosaic_0001>
module attributes {stable_mosaic.version = 11 : i64} {
  func.func @_block_kernel(%arg0: i32, %arg1: memref<1x16x64xf32, #tpu.memory_space<vmem>>, %arg2: memref<1x64xf32, #tpu.memory_space<vmem>>, %arg3: memref<64x192xbf16, #tpu.memory_space<vmem>>, %arg4: memref<64x64xbf16, #tpu.memory_space<vmem>>, %arg5: memref<1x64xf32, #tpu.memory_space<vmem>>, %arg6: memref<64x256xbf16, #tpu.memory_space<vmem>>, %arg7: memref<256x64xbf16, #tpu.memory_space<vmem>>, %arg8: memref<1x16x64xf32, #tpu.memory_space<vmem>>) attributes {dimension_semantics = [#tpu.dimension_semantics<parallel>], iteration_bounds = array<i64: 2>, scalar_prefetch = 0 : i64, scratch_operands = 0 : i64, tpu.core_type = #tpu.core_type<tc>, window_params = [{transform_indices = @transform_0, window_bounds = array<i64: 1, 16, 64>}, {pipeline_mode = #tpu.pipeline_mode<synchronous>, transform_indices = @transform_1, window_bounds = array<i64: 1, 64>}, {pipeline_mode = #tpu.pipeline_mode<synchronous>, transform_indices = @transform_2, window_bounds = array<i64: 64, 192>}, {pipeline_mode = #tpu.pipeline_mode<synchronous>, transform_indices = @transform_3, window_bounds = array<i64: 64, 64>}, {pipeline_mode = #tpu.pipeline_mode<synchronous>, transform_indices = @transform_4, window_bounds = array<i64: 1, 64>}, {pipeline_mode = #tpu.pipeline_mode<synchronous>, transform_indices = @transform_5, window_bounds = array<i64: 64, 256>}, {pipeline_mode = #tpu.pipeline_mode<synchronous>, transform_indices = @transform_6, window_bounds = array<i64: 256, 64>}, {transform_indices = @transform_7, window_bounds = array<i64: 1, 16, 64>}]} {
    %c0 = arith.constant 0 : index
    %c0_0 = arith.constant 0 : index
    %c0_1 = arith.constant 0 : index
    %0 = vector.load %arg1[%c0, %c0_0, %c0_1] : memref<1x16x64xf32, #tpu.memory_space<vmem>>, vector<1x16x64xf32>
    %1 = vector.shape_cast %0 : vector<1x16x64xf32> to vector<16x64xf32>
    %c0_2 = arith.constant 0 : index
    %c0_3 = arith.constant 0 : index
    %2 = vector.load %arg2[%c0_2, %c0_3] : memref<1x64xf32, #tpu.memory_space<vmem>>, vector<1x64xf32>
    %cst = arith.constant dense<0.000000e+00> : vector<16xf32>
    %3 = vector.multi_reduction <add>, %1, %cst [1] : vector<16x64xf32> to vector<16xf32>
    %4 = vector.shape_cast %3 : vector<16xf32> to vector<16x1xf32>
    %cst_4 = arith.constant 6.400000e+01 : f32
    %5 = vector.broadcast %cst_4 : f32 to vector<16x1xf32>
    %6 = arith.divf %4, %5 : vector<16x1xf32>
    %7 = vector.broadcast %6 : vector<16x1xf32> to vector<16x64xf32>
    %8 = arith.subf %1, %7 : vector<16x64xf32>
    %9 = arith.mulf %8, %8 : vector<16x64xf32>
    %cst_5 = arith.constant dense<0.000000e+00> : vector<16xf32>
    %10 = vector.multi_reduction <add>, %9, %cst_5 [1] : vector<16x64xf32> to vector<16xf32>
    %11 = vector.shape_cast %10 : vector<16xf32> to vector<16x1xf32>
    %cst_6 = arith.constant 6.400000e+01 : f32
    %12 = vector.broadcast %cst_6 : f32 to vector<16x1xf32>
    %13 = arith.divf %11, %12 : vector<16x1xf32>
    %cst_7 = arith.constant 9.99999974E-6 : f32
    %14 = vector.broadcast %cst_7 : f32 to vector<16x1xf32>
    %15 = arith.addf %13, %14 : vector<16x1xf32>
    %16 = math.rsqrt %15 : vector<16x1xf32>
    %17 = vector.broadcast %16 : vector<16x1xf32> to vector<16x64xf32>
    %18 = arith.mulf %8, %17 : vector<16x64xf32>
    %19 = vector.broadcast %2 : vector<1x64xf32> to vector<16x64xf32>
    %20 = arith.mulf %18, %19 : vector<16x64xf32>
    %21 = arith.truncf %20 : vector<16x64xf32> to vector<16x64xbf16>
    %c0_8 = arith.constant 0 : index
    %c0_9 = arith.constant 0 : index
    %22 = vector.load %arg3[%c0_8, %c0_9] : memref<64x192xbf16, #tpu.memory_space<vmem>>, vector<64x192xbf16>
    %cst_10 = arith.constant dense<0.000000e+00> : vector<16x192xf32>
    %23 = tpu.matmul %21, %22, %cst_10 {dimension_numbers = #tpu.dot_dimension_numbers<[1], [0], [0], [1], [0, 0, 1, 1], [], []>} : vector<16x64xbf16>, vector<64x192xbf16>, vector<16x192xf32> -> vector<16x192xf32>
    %24 = tpu.iota {dimensions = array<i32: 0>} : vector<16x16xi32>
    %25 = tpu.iota {dimensions = array<i32: 1>} : vector<16x16xi32>
    %26 = arith.cmpi sge, %24, %25 : vector<16x16xi32>
    %c0_11 = arith.constant 0 : index
    %c0_12 = arith.constant 0 : index
    %27 = vector.load %arg4[%c0_11, %c0_12] : memref<64x64xbf16, #tpu.memory_space<vmem>>, vector<64x64xbf16>
    %cst_13 = arith.constant 0.000000e+00 : f32
    %28 = vector.broadcast %cst_13 : f32 to vector<16x64xf32>
    %29 = vector.extract_strided_slice %23 {offsets = [0, 0], sizes = [16, 32], strides = [1, 1]} : vector<16x192xf32> to vector<16x32xf32>
    %30 = arith.truncf %29 : vector<16x32xf32> to vector<16x32xbf16>
    %31 = vector.extract_strided_slice %23 {offsets = [0, 64], sizes = [16, 32], strides = [1, 1]} : vector<16x192xf32> to vector<16x32xf32>
    %32 = arith.truncf %31 : vector<16x32xf32> to vector<16x32xbf16>
    %33 = vector.extract_strided_slice %23 {offsets = [0, 128], sizes = [16, 32], strides = [1, 1]} : vector<16x192xf32> to vector<16x32xf32>
    %34 = arith.truncf %33 : vector<16x32xf32> to vector<16x32xbf16>
    %cst_14 = arith.constant dense<0.000000e+00> : vector<16x16xf32>
    %35 = tpu.matmul %30, %32, %cst_14 {dimension_numbers = #tpu.dot_dimension_numbers<[1], [1], [0], [0], [0, 0, 1, 0], [], []>} : vector<16x32xbf16>, vector<16x32xbf16>, vector<16x16xf32> -> vector<16x16xf32>
    %cst_15 = arith.constant 0.176776692 : f32
    %36 = vector.broadcast %cst_15 : f32 to vector<16x16xf32>
    %37 = arith.mulf %35, %36 : vector<16x16xf32>
    %cst_16 = arith.constant -1.000000e+30 : f32
    %38 = vector.broadcast %cst_16 : f32 to vector<16x16xf32>
    %39 = arith.select %26, %37, %38 : vector<16x16xi1>, vector<16x16xf32>
    %cst_17 = arith.constant dense<0xFF800000> : vector<16xf32>
    %40 = vector.multi_reduction <maximumf>, %39, %cst_17 [1] : vector<16x16xf32> to vector<16xf32>
    %41 = vector.shape_cast %40 : vector<16xf32> to vector<16x1xf32>
    %42 = vector.broadcast %41 : vector<16x1xf32> to vector<16x16xf32>
    %43 = arith.subf %39, %42 : vector<16x16xf32>
    %44 = math.exp %43 : vector<16x16xf32>
    %cst_18 = arith.constant dense<0.000000e+00> : vector<16xf32>
    %45 = vector.multi_reduction <add>, %44, %cst_18 [1] : vector<16x16xf32> to vector<16xf32>
    %46 = vector.shape_cast %45 : vector<16xf32> to vector<16x1xf32>
    %47 = vector.broadcast %46 : vector<16x1xf32> to vector<16x16xf32>
    %48 = arith.divf %44, %47 : vector<16x16xf32>
    %49 = arith.truncf %48 : vector<16x16xf32> to vector<16x16xbf16>
    %cst_19 = arith.constant dense<0.000000e+00> : vector<16x32xf32>
    %50 = tpu.matmul %49, %34, %cst_19 {dimension_numbers = #tpu.dot_dimension_numbers<[1], [0], [0], [1], [0, 0, 1, 1], [], []>} : vector<16x16xbf16>, vector<16x32xbf16>, vector<16x32xf32> -> vector<16x32xf32>
    %51 = arith.truncf %50 : vector<16x32xf32> to vector<16x32xbf16>
    %52 = vector.extract_strided_slice %27 {offsets = [0, 0], sizes = [32, 64], strides = [1, 1]} : vector<64x64xbf16> to vector<32x64xbf16>
    %cst_20 = arith.constant dense<0.000000e+00> : vector<16x64xf32>
    %53 = tpu.matmul %51, %52, %cst_20 {dimension_numbers = #tpu.dot_dimension_numbers<[1], [0], [0], [1], [0, 0, 1, 1], [], []>} : vector<16x32xbf16>, vector<32x64xbf16>, vector<16x64xf32> -> vector<16x64xf32>
    %54 = arith.addf %28, %53 : vector<16x64xf32>
    %55 = vector.extract_strided_slice %23 {offsets = [0, 32], sizes = [16, 32], strides = [1, 1]} : vector<16x192xf32> to vector<16x32xf32>
    %56 = arith.truncf %55 : vector<16x32xf32> to vector<16x32xbf16>
    %57 = vector.extract_strided_slice %23 {offsets = [0, 96], sizes = [16, 32], strides = [1, 1]} : vector<16x192xf32> to vector<16x32xf32>
    %58 = arith.truncf %57 : vector<16x32xf32> to vector<16x32xbf16>
    %59 = vector.extract_strided_slice %23 {offsets = [0, 160], sizes = [16, 32], strides = [1, 1]} : vector<16x192xf32> to vector<16x32xf32>
    %60 = arith.truncf %59 : vector<16x32xf32> to vector<16x32xbf16>
    %cst_21 = arith.constant dense<0.000000e+00> : vector<16x16xf32>
    %61 = tpu.matmul %56, %58, %cst_21 {dimension_numbers = #tpu.dot_dimension_numbers<[1], [1], [0], [0], [0, 0, 1, 0], [], []>} : vector<16x32xbf16>, vector<16x32xbf16>, vector<16x16xf32> -> vector<16x16xf32>
    %cst_22 = arith.constant 0.176776692 : f32
    %62 = vector.broadcast %cst_22 : f32 to vector<16x16xf32>
    %63 = arith.mulf %61, %62 : vector<16x16xf32>
    %cst_23 = arith.constant -1.000000e+30 : f32
    %64 = vector.broadcast %cst_23 : f32 to vector<16x16xf32>
    %65 = arith.select %26, %63, %64 : vector<16x16xi1>, vector<16x16xf32>
    %cst_24 = arith.constant dense<0xFF800000> : vector<16xf32>
    %66 = vector.multi_reduction <maximumf>, %65, %cst_24 [1] : vector<16x16xf32> to vector<16xf32>
    %67 = vector.shape_cast %66 : vector<16xf32> to vector<16x1xf32>
    %68 = vector.broadcast %67 : vector<16x1xf32> to vector<16x16xf32>
    %69 = arith.subf %65, %68 : vector<16x16xf32>
    %70 = math.exp %69 : vector<16x16xf32>
    %cst_25 = arith.constant dense<0.000000e+00> : vector<16xf32>
    %71 = vector.multi_reduction <add>, %70, %cst_25 [1] : vector<16x16xf32> to vector<16xf32>
    %72 = vector.shape_cast %71 : vector<16xf32> to vector<16x1xf32>
    %73 = vector.broadcast %72 : vector<16x1xf32> to vector<16x16xf32>
    %74 = arith.divf %70, %73 : vector<16x16xf32>
    %75 = arith.truncf %74 : vector<16x16xf32> to vector<16x16xbf16>
    %cst_26 = arith.constant dense<0.000000e+00> : vector<16x32xf32>
    %76 = tpu.matmul %75, %60, %cst_26 {dimension_numbers = #tpu.dot_dimension_numbers<[1], [0], [0], [1], [0, 0, 1, 1], [], []>} : vector<16x16xbf16>, vector<16x32xbf16>, vector<16x32xf32> -> vector<16x32xf32>
    %77 = arith.truncf %76 : vector<16x32xf32> to vector<16x32xbf16>
    %78 = vector.extract_strided_slice %27 {offsets = [32, 0], sizes = [32, 64], strides = [1, 1]} : vector<64x64xbf16> to vector<32x64xbf16>
    %cst_27 = arith.constant dense<0.000000e+00> : vector<16x64xf32>
    %79 = tpu.matmul %77, %78, %cst_27 {dimension_numbers = #tpu.dot_dimension_numbers<[1], [0], [0], [1], [0, 0, 1, 1], [], []>} : vector<16x32xbf16>, vector<32x64xbf16>, vector<16x64xf32> -> vector<16x64xf32>
    %80 = arith.addf %54, %79 : vector<16x64xf32>
    %81 = arith.addf %1, %80 : vector<16x64xf32>
    %c0_28 = arith.constant 0 : index
    %c0_29 = arith.constant 0 : index
    %82 = vector.load %arg5[%c0_28, %c0_29] : memref<1x64xf32, #tpu.memory_space<vmem>>, vector<1x64xf32>
    %cst_30 = arith.constant dense<0.000000e+00> : vector<16xf32>
    %83 = vector.multi_reduction <add>, %81, %cst_30 [1] : vector<16x64xf32> to vector<16xf32>
    %84 = vector.shape_cast %83 : vector<16xf32> to vector<16x1xf32>
    %cst_31 = arith.constant 6.400000e+01 : f32
    %85 = vector.broadcast %cst_31 : f32 to vector<16x1xf32>
    %86 = arith.divf %84, %85 : vector<16x1xf32>
    %87 = vector.broadcast %86 : vector<16x1xf32> to vector<16x64xf32>
    %88 = arith.subf %81, %87 : vector<16x64xf32>
    %89 = arith.mulf %88, %88 : vector<16x64xf32>
    %cst_32 = arith.constant dense<0.000000e+00> : vector<16xf32>
    %90 = vector.multi_reduction <add>, %89, %cst_32 [1] : vector<16x64xf32> to vector<16xf32>
    %91 = vector.shape_cast %90 : vector<16xf32> to vector<16x1xf32>
    %cst_33 = arith.constant 6.400000e+01 : f32
    %92 = vector.broadcast %cst_33 : f32 to vector<16x1xf32>
    %93 = arith.divf %91, %92 : vector<16x1xf32>
    %cst_34 = arith.constant 9.99999974E-6 : f32
    %94 = vector.broadcast %cst_34 : f32 to vector<16x1xf32>
    %95 = arith.addf %93, %94 : vector<16x1xf32>
    %96 = math.rsqrt %95 : vector<16x1xf32>
    %97 = vector.broadcast %96 : vector<16x1xf32> to vector<16x64xf32>
    %98 = arith.mulf %88, %97 : vector<16x64xf32>
    %99 = vector.broadcast %82 : vector<1x64xf32> to vector<16x64xf32>
    %100 = arith.mulf %98, %99 : vector<16x64xf32>
    %101 = arith.truncf %100 : vector<16x64xf32> to vector<16x64xbf16>
    %c0_35 = arith.constant 0 : index
    %c0_36 = arith.constant 0 : index
    %102 = vector.load %arg6[%c0_35, %c0_36] : memref<64x256xbf16, #tpu.memory_space<vmem>>, vector<64x256xbf16>
    %cst_37 = arith.constant dense<0.000000e+00> : vector<16x256xf32>
    %103 = tpu.matmul %101, %102, %cst_37 {dimension_numbers = #tpu.dot_dimension_numbers<[1], [0], [0], [1], [0, 0, 1, 1], [], []>} : vector<16x64xbf16>, vector<64x256xbf16>, vector<16x256xf32> -> vector<16x256xf32>
    %cst_38 = arith.constant 5.000000e-01 : f32
    %104 = vector.broadcast %cst_38 : f32 to vector<16x256xf32>
    %105 = arith.mulf %104, %103 : vector<16x256xf32>
    %cst_39 = arith.constant 4.471500e-02 : f32
    %106 = vector.broadcast %cst_39 : f32 to vector<16x256xf32>
    %107 = arith.mulf %106, %103 : vector<16x256xf32>
    %108 = arith.mulf %107, %103 : vector<16x256xf32>
    %109 = arith.mulf %108, %103 : vector<16x256xf32>
    %110 = arith.addf %103, %109 : vector<16x256xf32>
    %cst_40 = arith.constant 0.797884583 : f32
    %111 = vector.broadcast %cst_40 : f32 to vector<16x256xf32>
    %112 = arith.mulf %111, %110 : vector<16x256xf32>
    %113 = math.tanh %112 : vector<16x256xf32>
    %cst_41 = arith.constant 1.000000e+00 : f32
    %114 = vector.broadcast %cst_41 : f32 to vector<16x256xf32>
    %115 = arith.addf %114, %113 : vector<16x256xf32>
    %116 = arith.mulf %105, %115 : vector<16x256xf32>
    %117 = arith.truncf %116 : vector<16x256xf32> to vector<16x256xbf16>
    %c0_42 = arith.constant 0 : index
    %c0_43 = arith.constant 0 : index
    %118 = vector.load %arg7[%c0_42, %c0_43] : memref<256x64xbf16, #tpu.memory_space<vmem>>, vector<256x64xbf16>
    %cst_44 = arith.constant dense<0.000000e+00> : vector<16x64xf32>
    %119 = tpu.matmul %117, %118, %cst_44 {dimension_numbers = #tpu.dot_dimension_numbers<[1], [0], [0], [1], [0, 0, 1, 1], [], []>} : vector<16x256xbf16>, vector<256x64xbf16>, vector<16x64xf32> -> vector<16x64xf32>
    %120 = arith.addf %81, %119 : vector<16x64xf32>
    %c0_45 = arith.constant 0 : index
    %c0_46 = arith.constant 0 : index
    %c0_47 = arith.constant 0 : index
    %121 = vector.load %arg8[%c0_45, %c0_46, %c0_47] : memref<1x16x64xf32, #tpu.memory_space<vmem>>, vector<1x16x64xf32>
    %122 = vector.shape_cast %121 : vector<1x16x64xf32> to vector<16x64xf32>
    %123 = vector.shape_cast %120 : vector<16x64xf32> to vector<1x16x64xf32>
    tpu.vector_store %arg8[%c0_45, %c0_46, %c0_47], %123 {strides = array<i32>} : memref<1x16x64xf32, #tpu.memory_space<vmem>>, vector<1x16x64xf32>,
    return
  }
  func.func @transform_0(%arg0: i32) -> (i32, i32, i32) {
    %c0_i32 = arith.constant 0 : i32
    %c0_i32_0 = arith.constant 0 : i32
    %c0_i32_1 = arith.constant 0 : i32
    return %arg0, %c0_i32, %c0_i32_0 : i32, i32, i32
  }
  func.func @transform_1(%arg0: i32) -> (i32, i32) {
    %c0_i32 = arith.constant 0 : i32
    %c0_i32_0 = arith.constant 0 : i32
    %c0_i32_1 = arith.constant 0 : i32
    return %c0_i32, %c0_i32_0 : i32, i32
  }
  func.func @transform_2(%arg0: i32) -> (i32, i32) {
    %c0_i32 = arith.constant 0 : i32
    %c0_i32_0 = arith.constant 0 : i32
    %c0_i32_1 = arith.constant 0 : i32
    return %c0_i32, %c0_i32_0 : i32, i32
  }
  func.func @transform_3(%arg0: i32) -> (i32, i32) {
    %c0_i32 = arith.constant 0 : i32
    %c0_i32_0 = arith.constant 0 : i32
    %c0_i32_1 = arith.constant 0 : i32
    return %c0_i32, %c0_i32_0 : i32, i32
  }
  func.func @transform_4(%arg0: i32) -> (i32, i32) {
    %c0_i32 = arith.constant 0 : i32
    %c0_i32_0 = arith.constant 0 : i32
    %c0_i32_1 = arith.constant 0 : i32
    return %c0_i32, %c0_i32_0 : i32, i32
  }
  func.func @transform_5(%arg0: i32) -> (i32, i32) {
    %c0_i32 = arith.constant 0 : i32
    %c0_i32_0 = arith.constant 0 : i32
    %c0_i32_1 = arith.constant 0 : i32
    return %c0_i32, %c0_i32_0 : i32, i32
  }
  func.func @transform_6(%arg0: i32) -> (i32, i32) {
    %c0_i32 = arith.constant 0 : i32
    %c0_i32_0 = arith.constant 0 : i32
    %c0_i32_1 = arith.constant 0 : i32
    return %c0_i32, %c0_i32_0 : i32, i32
  }
  func.func @transform_7(%arg0: i32) -> (i32, i32, i32) {
    %c0_i32 = arith.constant 0 : i32
    %c0_i32_0 = arith.constant 0 : i32
    %c0_i32_1 = arith.constant 0 : i32
    return %arg0, %c0_i32, %c0_i32_0 : i32, i32, i32
  }
}

module attributes {stable_mosaic.version = 11 : i64} {
  func.func @_head_ce_kernel(%arg0: i32, %arg1: i32, %arg2: memref<8x64xf32, #tpu.memory_space<vmem>>, %arg3: memref<1x64xf32, #tpu.memory_space<vmem>>, %arg4: memref<64x128xbf16, #tpu.memory_space<vmem>>, %arg5: memref<8x1xi32, #tpu.memory_space<vmem>>, %arg6: memref<8x128xf32, #tpu.memory_space<vmem>>, %arg7: memref<8x1xf32, #tpu.memory_space<vmem>>, %arg8: memref<8x64xbf16, #tpu.memory_space<vmem>>, %arg9: memref<8x1xf32, #tpu.memory_space<vmem>>, %arg10: memref<8x1xf32, #tpu.memory_space<vmem>>, %arg11: memref<8x1xf32, #tpu.memory_space<vmem>>) attributes {dimension_semantics = [#tpu.dimension_semantics<parallel>, #tpu.dimension_semantics<arbitrary>], iteration_bounds = array<i64: 4, 2>, scalar_prefetch = 0 : i64, scratch_operands = 4 : i64, tpu.core_type = #tpu.core_type<tc>, window_params = [{transform_indices = @transform_0, window_bounds = array<i64: 8, 64>}, {pipeline_mode = #tpu.pipeline_mode<synchronous>, transform_indices = @transform_1, window_bounds = array<i64: 1, 64>}, {transform_indices = @transform_2, window_bounds = array<i64: 64, 128>}, {transform_indices = @transform_3, window_bounds = array<i64: 8, 1>}, {transform_indices = @transform_4, window_bounds = array<i64: 8, 128>}, {transform_indices = @transform_5, window_bounds = array<i64: 8, 1>}]} {
    %c0_i32 = arith.constant 0 : i32
    %0 = arith.cmpi eq, %arg1, %c0_i32 : i32
    %1 = arith.extui %0 : i1 to i32
    %c0_i32_0 = arith.constant 0 : i32
    %2 = arith.cmpi ne, %1, %c0_i32_0 : i32
    scf.if %2 {
      %c0_25 = arith.constant 0 : index
      %c0_26 = arith.constant 0 : index
      %40 = vector.load %arg2[%c0_25, %c0_26] : memref<8x64xf32, #tpu.memory_space<vmem>>, vector<8x64xf32>
      %c0_27 = arith.constant 0 : index
      %c0_28 = arith.constant 0 : index
      %41 = vector.load %arg3[%c0_27, %c0_28] : memref<1x64xf32, #tpu.memory_space<vmem>>, vector<1x64xf32>
      %cst_29 = arith.constant dense<0.000000e+00> : vector<8xf32>
      %42 = vector.multi_reduction <add>, %40, %cst_29 [1] : vector<8x64xf32> to vector<8xf32>
      %43 = vector.shape_cast %42 : vector<8xf32> to vector<8x1xf32>
      %cst_30 = arith.constant 6.400000e+01 : f32
      %44 = vector.broadcast %cst_30 : f32 to vector<8x1xf32>
      %45 = arith.divf %43, %44 : vector<8x1xf32>
      %46 = vector.broadcast %45 : vector<8x1xf32> to vector<8x64xf32>
      %47 = arith.subf %40, %46 : vector<8x64xf32>
      %48 = arith.mulf %47, %47 : vector<8x64xf32>
      %cst_31 = arith.constant dense<0.000000e+00> : vector<8xf32>
      %49 = vector.multi_reduction <add>, %48, %cst_31 [1] : vector<8x64xf32> to vector<8xf32>
      %50 = vector.shape_cast %49 : vector<8xf32> to vector<8x1xf32>
      %cst_32 = arith.constant 6.400000e+01 : f32
      %51 = vector.broadcast %cst_32 : f32 to vector<8x1xf32>
      %52 = arith.divf %50, %51 : vector<8x1xf32>
      %cst_33 = arith.constant 9.99999974E-6 : f32
      %53 = vector.broadcast %cst_33 : f32 to vector<8x1xf32>
      %54 = arith.addf %52, %53 : vector<8x1xf32>
      %55 = math.rsqrt %54 : vector<8x1xf32>
      %56 = vector.broadcast %55 : vector<8x1xf32> to vector<8x64xf32>
      %57 = arith.mulf %47, %56 : vector<8x64xf32>
      %58 = vector.broadcast %41 : vector<1x64xf32> to vector<8x64xf32>
      %59 = arith.mulf %57, %58 : vector<8x64xf32>
      %60 = arith.truncf %59 : vector<8x64xf32> to vector<8x64xbf16>
      %c0_34 = arith.constant 0 : index
      %c0_35 = arith.constant 0 : index
      %61 = vector.load %arg8[%c0_34, %c0_35] : memref<8x64xbf16, #tpu.memory_space<vmem>>, vector<8x64xbf16>
      tpu.vector_store %arg8[%c0_34, %c0_35], %60 {strides = array<i32>} : memref<8x64xbf16, #tpu.memory_space<vmem>>, vector<8x64xbf16>,
      %cst_36 = arith.constant -1.000000e+30 : f32
      %62 = vector.broadcast %cst_36 : f32 to vector<8x1xf32>
      %c0_37 = arith.constant 0 : index
      %c0_38 = arith.constant 0 : index
      %63 = vector.load %arg9[%c0_37, %c0_38] : memref<8x1xf32, #tpu.memory_space<vmem>>, vector<8x1xf32>
      tpu.vector_store %arg9[%c0_37, %c0_38], %62 {strides = array<i32>} : memref<8x1xf32, #tpu.memory_space<vmem>>, vector<8x1xf32>,
      %cst_39 = arith.constant 0.000000e+00 : f32
      %64 = vector.broadcast %cst_39 : f32 to vector<8x1xf32>
      %c0_40 = arith.constant 0 : index
      %c0_41 = arith.constant 0 : index
      %65 = vector.load %arg10[%c0_40, %c0_41] : memref<8x1xf32, #tpu.memory_space<vmem>>, vector<8x1xf32>
      tpu.vector_store %arg10[%c0_40, %c0_41], %64 {strides = array<i32>} : memref<8x1xf32, #tpu.memory_space<vmem>>, vector<8x1xf32>,
      %cst_42 = arith.constant 0.000000e+00 : f32
      %66 = vector.broadcast %cst_42 : f32 to vector<8x1xf32>
      %c0_43 = arith.constant 0 : index
      %c0_44 = arith.constant 0 : index
      %67 = vector.load %arg11[%c0_43, %c0_44] : memref<8x1xf32, #tpu.memory_space<vmem>>, vector<8x1xf32>
      tpu.vector_store %arg11[%c0_43, %c0_44], %66 {strides = array<i32>} : memref<8x1xf32, #tpu.memory_space<vmem>>, vector<8x1xf32>,
    } else {
    }
    %c0 = arith.constant 0 : index
    %c0_1 = arith.constant 0 : index
    %3 = vector.load %arg8[%c0, %c0_1] : memref<8x64xbf16, #tpu.memory_space<vmem>>, vector<8x64xbf16>
    %c0_2 = arith.constant 0 : index
    %c0_3 = arith.constant 0 : index
    %4 = vector.load %arg4[%c0_2, %c0_3] : memref<64x128xbf16, #tpu.memory_space<vmem>>, vector<64x128xbf16>
    %cst = arith.constant dense<0.000000e+00> : vector<8x128xf32>
    %5 = tpu.matmul %3, %4, %cst {dimension_numbers = #tpu.dot_dimension_numbers<[1], [0], [0], [1], [0, 0, 1, 1], [], []>} : vector<8x64xbf16>, vector<64x128xbf16>, vector<8x128xf32> -> vector<8x128xf32>
    %c0_4 = arith.constant 0 : index
    %c0_5 = arith.constant 0 : index
    %6 = vector.load %arg6[%c0_4, %c0_5] : memref<8x128xf32, #tpu.memory_space<vmem>>, vector<8x128xf32>
    tpu.vector_store %arg6[%c0_4, %c0_5], %5 {strides = array<i32>} : memref<8x128xf32, #tpu.memory_space<vmem>>, vector<8x128xf32>,
    %c0_6 = arith.constant 0 : index
    %c0_7 = arith.constant 0 : index
    %7 = vector.load %arg5[%c0_6, %c0_7] : memref<8x1xi32, #tpu.memory_space<vmem>>, vector<8x1xi32>
    %c0_8 = arith.constant 0 : index
    %c0_9 = arith.constant 0 : index
    %8 = vector.load %arg9[%c0_8, %c0_9] : memref<8x1xf32, #tpu.memory_space<vmem>>, vector<8x1xf32>
    %cst_10 = arith.constant dense<0xFF800000> : vector<8xf32>
    %9 = vector.multi_reduction <maximumf>, %5, %cst_10 [1] : vector<8x128xf32> to vector<8xf32>
    %10 = vector.shape_cast %9 : vector<8xf32> to vector<8x1xf32>
    %11 = arith.maximumf %8, %10 : vector<8x1xf32>
    %c0_11 = arith.constant 0 : index
    %c0_12 = arith.constant 0 : index
    %12 = vector.load %arg10[%c0_11, %c0_12] : memref<8x1xf32, #tpu.memory_space<vmem>>, vector<8x1xf32>
    %13 = arith.subf %8, %11 : vector<8x1xf32>
    %14 = math.exp %13 : vector<8x1xf32>
    %15 = arith.mulf %12, %14 : vector<8x1xf32>
    %16 = vector.broadcast %11 : vector<8x1xf32> to vector<8x128xf32>
    %17 = arith.subf %5, %16 : vector<8x128xf32>
    %18 = math.exp %17 : vector<8x128xf32>
    %cst_13 = arith.constant dense<0.000000e+00> : vector<8xf32>
    %19 = vector.multi_reduction <add>, %18, %cst_13 [1] : vector<8x128xf32> to vector<8xf32>
    %20 = vector.shape_cast %19 : vector<8xf32> to vector<8x1xf32>
    %21 = arith.addf %15, %20 : vector<8x1xf32>
    %c0_14 = arith.constant 0 : index
    %c0_15 = arith.constant 0 : index
    %22 = vector.load %arg10[%c0_14, %c0_15] : memref<8x1xf32, #tpu.memory_space<vmem>>, vector<8x1xf32>
    tpu.vector_store %arg10[%c0_14, %c0_15], %21 {strides = array<i32>} : memref<8x1xf32, #tpu.memory_space<vmem>>, vector<8x1xf32>,
    %c0_16 = arith.constant 0 : index
    %c0_17 = arith.constant 0 : index
    %23 = vector.load %arg9[%c0_16, %c0_17] : memref<8x1xf32, #tpu.memory_space<vmem>>, vector<8x1xf32>
    tpu.vector_store %arg9[%c0_16, %c0_17], %11 {strides = array<i32>} : memref<8x1xf32, #tpu.memory_space<vmem>>, vector<8x1xf32>,
    %24 = tpu.iota {dimensions = array<i32: 1>} : vector<8x128xi32>
    %c128_i32 = arith.constant 128 : i32
    %25 = arith.muli %arg1, %c128_i32 : i32
    %26 = vector.broadcast %25 : i32 to vector<8x128xi32>
    %27 = arith.addi %24, %26 : vector<8x128xi32>
    %c0_18 = arith.constant 0 : index
    %c0_19 = arith.constant 0 : index
    %28 = vector.load %arg11[%c0_18, %c0_19] : memref<8x1xf32, #tpu.memory_space<vmem>>, vector<8x1xf32>
    %29 = vector.broadcast %7 : vector<8x1xi32> to vector<8x128xi32>
    %30 = arith.cmpi eq, %27, %29 : vector<8x128xi32>
    %cst_20 = arith.constant 0.000000e+00 : f32
    %31 = vector.broadcast %cst_20 : f32 to vector<8x128xf32>
    %32 = arith.select %30, %5, %31 : vector<8x128xi1>, vector<8x128xf32>
    %cst_21 = arith.constant dense<0.000000e+00> : vector<8xf32>
    %33 = vector.multi_reduction <add>, %32, %cst_21 [1] : vector<8x128xf32> to vector<8xf32>
    %34 = vector.shape_cast %33 : vector<8xf32> to vector<8x1xf32>
    %35 = arith.addf %28, %34 : vector<8x1xf32>
    %c0_22 = arith.constant 0 : index
    %c0_23 = arith.constant 0 : index
    %36 = vector.load %arg11[%c0_22, %c0_23] : memref<8x1xf32, #tpu.memory_space<vmem>>, vector<8x1xf32>
    tpu.vector_store %arg11[%c0_22, %c0_23], %35 {strides = array<i32>} : memref<8x1xf32, #tpu.memory_space<vmem>>, vector<8x1xf32>,
    %c1_i32 = arith.constant 1 : i32
    %37 = arith.cmpi eq, %arg1, %c1_i32 : i32
    %38 = arith.extui %37 : i1 to i32
    %c0_i32_24 = arith.constant 0 : i32
    %39 = arith.cmpi ne, %38, %c0_i32_24 : i32
    scf.if %39 {
      %c0_25 = arith.constant 0 : index
      %c0_26 = arith.constant 0 : index
      %40 = vector.load %arg9[%c0_25, %c0_26] : memref<8x1xf32, #tpu.memory_space<vmem>>, vector<8x1xf32>
      %c0_27 = arith.constant 0 : index
      %c0_28 = arith.constant 0 : index
      %41 = vector.load %arg10[%c0_27, %c0_28] : memref<8x1xf32, #tpu.memory_space<vmem>>, vector<8x1xf32>
      %42 = math.log %41 : vector<8x1xf32>
      %43 = arith.addf %40, %42 : vector<8x1xf32>
      %c0_i32_29 = arith.constant 0 : i32
      %44 = vector.broadcast %c0_i32_29 : i32 to vector<8x1xi32>
      %45 = arith.cmpi ne, %7, %44 : vector<8x1xi32>
      %46 = arith.extui %45 : vector<8x1xi1> to vector<8x1xi32>
      %47 = arith.sitofp %46 : vector<8x1xi32> to vector<8x1xf32>
      %c0_30 = arith.constant 0 : index
      %c0_31 = arith.constant 0 : index
      %48 = vector.load %arg11[%c0_30, %c0_31] : memref<8x1xf32, #tpu.memory_space<vmem>>, vector<8x1xf32>
      %49 = arith.subf %43, %48 : vector<8x1xf32>
      %50 = arith.mulf %49, %47 : vector<8x1xf32>
      %c0_32 = arith.constant 0 : index
      %c0_33 = arith.constant 0 : index
      %51 = vector.load %arg7[%c0_32, %c0_33] : memref<8x1xf32, #tpu.memory_space<vmem>>, vector<8x1xf32>
      tpu.vector_store %arg7[%c0_32, %c0_33], %50 {strides = array<i32>} : memref<8x1xf32, #tpu.memory_space<vmem>>, vector<8x1xf32>,
    } else {
    }
    return
  }
  func.func @transform_0(%arg0: i32, %arg1: i32) -> (i32, i32) {
    %c0_i32 = arith.constant 0 : i32
    %c0_i32_0 = arith.constant 0 : i32
    return %arg0, %c0_i32 : i32, i32
  }
  func.func @transform_1(%arg0: i32, %arg1: i32) -> (i32, i32) {
    %c0_i32 = arith.constant 0 : i32
    %c0_i32_0 = arith.constant 0 : i32
    %c0_i32_1 = arith.constant 0 : i32
    return %c0_i32, %c0_i32_0 : i32, i32
  }
  func.func @transform_2(%arg0: i32, %arg1: i32) -> (i32, i32) {
    %c0_i32 = arith.constant 0 : i32
    %c0_i32_0 = arith.constant 0 : i32
    return %c0_i32, %arg1 : i32, i32
  }
  func.func @transform_3(%arg0: i32, %arg1: i32) -> (i32, i32) {
    %c0_i32 = arith.constant 0 : i32
    %c0_i32_0 = arith.constant 0 : i32
    return %arg0, %c0_i32 : i32, i32
  }
  func.func @transform_4(%arg0: i32, %arg1: i32) -> (i32, i32) {
    %c0_i32 = arith.constant 0 : i32
    return %arg0, %arg1 : i32, i32
  }
  func.func @transform_5(%arg0: i32, %arg1: i32) -> (i32, i32) {
    %c0_i32 = arith.constant 0 : i32
    %c0_i32_0 = arith.constant 0 : i32
    return %arg0, %c0_i32 : i32, i32
  }
}

</mosaic_0001>

<llo_original>
// kernel: _lambda_.5
$region0: #{_lambda_.5}
  #allocation0 [shape = 'u32[]', space=smem, size = 0x4, offset = 0x4, fixed_abs, tag = 'smem constant byte address 0x4 - core index']
  #allocation1 [shape = 'u32[72,128]{1,0:T(1,128)}', space=vmem, size = 0x9000, scoped, tag = 'internal scratch']
  #allocation2 [shape = 'bf16[8,64]{1,0:T(8,128)(2,1)}', space=vmem, size = 0x800, scoped, tag = 'scratch operand']
  #allocation3 [shape = 'f32[8,1]{1,0:T(8,128)}', space=vmem, size = 0x1000, scoped, tag = 'scratch operand']
  #allocation4 [shape = 'f32[8,1]{1,0:T(8,128)}', space=vmem, size = 0x1000, scoped, tag = 'scratch operand']
  #allocation5 [shape = 'f32[8,1]{1,0:T(8,128)}', space=vmem, size = 0x1000, scoped, tag = 'scratch operand']
  %s0 = inlined_call_operand.vmem [shape: f32[32,64], index: 0, kind: input, shape index: {}]
  %s1 = inlined_call_operand.vmem [shape: f32[1,64], index: 1, kind: input, shape index: {}]
  %s2 = inlined_call_operand.vmem [shape: bf16[64,256], index: 2, kind: input, shape index: {}]
  %s3 = inlined_call_operand.vmem [shape: s32[32,1], index: 3, kind: input, shape index: {}]
  %s4 = inlined_call_operand.hbm [shape: f32[32,256], index: 4, kind: output, shape index: {0}]
  %s5 = inlined_call_operand.vmem [shape: f32[32,1], index: 5, kind: output, shape index: {1}]
  %6 = xla_tuple %s4, %s5
  %s7 = sld [smem:[#allocation0]]
  $region106: #{_lambda_.5} parent=0
    _
  %s9 = ssub.s32 1, %s7
  %s10 = scalar_select 0, %s9, %s7
  $region1: #{_lambda_.5} parent=0
    #allocation6 [shape = 'u8[32768]{0}', space=vmem, size = 0x8000, scoped, tag = 'input window, operand 2']
    #allocation7 [shape = 'u8[8192]{0}', space=vmem, size = 0x2000, scoped, tag = 'output window, operand 0']
    #allocation8 [shape = 's32[2]{0}', space=sflag, size = 0x8, scoped, tag = 'scoped memory for _lambda_.5']
    %11 = vsyncpa [#allocation8], 0
    %s12 = scalar_lea.sflag [#allocation8], 1
    %13 = vsyncpa %s12, 0
    loop: start=0, step=1, limit=10
    $region2: #{_lambda_.5} parent=1 // loop_pre_header
      _
    $region3: #{_lambda_.5} parent=1 // loop_header
      %s15 = sphi 0, %s19
      %p16 = scmp.ge.s32.totalorder %s15, 10
      %s22 = sphi 0, %s34
      %s23 = sphi 0, %s30
      %s24 = sphi 0, %s22
      %s25 = sphi 0, %s23
      %s26 = sphi 0, %s24
      %s27 = sphi 0, %s25
      %s37 = sphi 0, %s39
      %s40 = sphi 0, %s37
      %s41 = sphi 0, %s40
      %s57 = sphi 0, %s41
      %s61 = sphi 0, %s61
      %s63 = sphi 0, %s61
      %s64 = sphi 0, %s63
      %s78 = sphi 0, %s64
      %s84 = sphi 0, %s86
      %s87 = sphi 0, %s84
      %s88 = sphi 0, %s87
      %s104 = sphi 0, %s88
      %s110 = sphi 0, %s112
      %s113 = sphi 0, %s110
      %s114 = sphi 0, %s113
      %s130 = sphi 0, %s114
      %s138 = sphi 0, %s140
      %s141 = sphi 0, %s138
      %s142 = sphi 0, %s141
      %s158 = sphi 0, %s142
      %s164 = sphi 0, %s166
      %s167 = sphi 0, %s164
      %s168 = sphi 0, %s167
      %s184 = sphi 0, %s168
    $region4: #{_lambda_.5} parent=1 // loop_header_branch
      %18 = sbr.rel (%p16) target = $region8
    $region5: #{_lambda_.5} parent=1 // loop_body
      %s20 = ssub.s32 %s15, 1
      %s21 = ssub.s32 %s15, 2
      %s28 = sadd.s32 1, %s23
      %p29 = scmp.ge.s32.totalorder %s28, 2
      %s30 = scalar_select %p29, 0, %s28
      %s31 = sadd.s32 1, %s22
      %s32 = scalar_select %p29, %s31, %s22
      %p33 = scmp.ge.s32.totalorder %s32, 4
      %s34 = scalar_select %p33, 0, %s32
      %s35 = ssub.s32 %s22, %s34
      %p36 = scmp.eq.s32.totalorder %s35, 0
      %s38 = sadd.s32 %s37, 1
      %s39 = scalar_select %p36, %s37, %s38
      %p42 = pneg %p36
      %p43 = scmp.eq.s32.totalorder %s15, 7
      %p44 = por %p42, %p43
      %p45 = scmp.ne.s32.totalorder %s37, %s40
      %p46 = scmp.eq.s32.totalorder %s15, 0
      %p47 = por %p45, %p46
      %p48 = scmp.ne.s32.totalorder %s37, %s40
      %p49 = scmp.eq.s32.totalorder %s20, 7
      %p50 = por %p48, %p49
      %p51 = scmp.ne.s32.totalorder %s40, %s41
      %p52 = scmp.eq.s32.totalorder %s20, 0
      %p53 = por %p51, %p52
      %p54 = scmp.ne.s32.totalorder %s40, %s41
      %p55 = scmp.eq.s32.totalorder %s21, 7
      %p56 = por %p54, %p55
      %p58 = scmp.ne.s32.totalorder %s41, %s57
      %p59 = scmp.eq.s32.totalorder %s21, 0
      %p60 = por %p58, %p59
      %s62 = sadd.s32 %s61, 1
      %p65 = scmp.eq.s32.totalorder %s15, 7
      %p66 = scmp.ne.s32.totalorder %s61, %s63
      %p67 = scmp.eq.s32.totalorder %s15, 0
      %p68 = por %p66, %p67
      %p69 = scmp.ne.s32.totalorder %s61, %s63
      %p70 = scmp.eq.s32.totalorder %s20, 7
      %p71 = por %p69, %p70
      %p72 = scmp.ne.s32.totalorder %s63, %s64
      %p73 = scmp.eq.s32.totalorder %s20, 0
      %p74 = por %p72, %p73
      %p75 = scmp.ne.s32.totalorder %s63, %s64
      %p76 = scmp.eq.s32.totalorder %s21, 7
      %p77 = por %p75, %p76
      %p79 = scmp.ne.s32.totalorder %s64, %s78
      %p80 = scmp.eq.s32.totalorder %s21, 0
      %p81 = por %p79, %p80
      %s82 = ssub.s32 %s23, %s30
      %p83 = scmp.eq.s32.totalorder %s82, 0
      %s85 = sadd.s32 %s84, 1
      %s86 = scalar_select %p83, %s84, %s85
      %p89 = pneg %p83
      %p90 = scmp.eq.s32.totalorder %s15, 7
      %p91 = por %p89, %p90
      %p92 = scmp.ne.s32.totalorder %s84, %s87
      %p93 = scmp.eq.s32.totalorder %s15, 0
      %p94 = por %p92, %p93
      %p95 = scmp.ne.s32.totalorder %s84, %s87
      %p96 = scmp.eq.s32.totalorder %s20, 7
      %p97 = por %p95, %p96
      %p98 = scmp.ne.s32.totalorder %s87, %s88
      %p99 = scmp.eq.s32.totalorder %s20, 0
      %p100 = por %p98, %p99
      %p101 = scmp.ne.s32.totalorder %s87, %s88
      %p102 = scmp.eq.s32.totalorder %s21, 7
      %p103 = por %p101, %p102
      %p105 = scmp.ne.s32.totalorder %s88, %s104
      %p106 = scmp.eq.s32.totalorder %s21, 0
      %p107 = por %p105, %p106
      %s108 = ssub.s32 %s22, %s34
      %p109 = scmp.eq.s32.totalorder %s108, 0
      %s111 = sadd.s32 %s110, 1
      %s112 = scalar_select %p109, %s110, %s111
      %p115 = pneg %p109
      %p116 = scmp.eq.s32.totalorder %s15, 7
      %p117 = por %p115, %p116
      %p118 = scmp.ne.s32.totalorder %s110, %s113
      %p119 = scmp.eq.s32.totalorder %s15, 0
      %p120 = por %p118, %p119
      %p121 = scmp.ne.s32.totalorder %s110, %s113
      %p122 = scmp.eq.s32.totalorder %s20, 7
      %p123 = por %p121, %p122
      %p124 = scmp.ne.s32.totalorder %s113, %s114
      %p125 = scmp.eq.s32.totalorder %s20, 0
      %p126 = por %p124, %p125
      %p127 = scmp.ne.s32.totalorder %s113, %s114
      %p128 = scmp.eq.s32.totalorder %s21, 7
      %p129 = por %p127, %p128
      %p131 = scmp.ne.s32.totalorder %s114, %s130
      %p132 = scmp.eq.s32.totalorder %s21, 0
      %p133 = por %p131, %p132
      %s134 = ssub.s32 %s22, %s34
      %s135 = ssub.s32 %s23, %s30
      %s136 = sor.u32 %s134, %s135
      %p137 = scmp.eq.s32.totalorder %s136, 0
      %s139 = sadd.s32 %s138, 1
      %s140 = scalar_select %p137, %s138, %s139
      %p143 = pneg %p137
      %p144 = scmp.eq.s32.totalorder %s15, 7
      %p145 = por %p143, %p144
      %p146 = scmp.ne.s32.totalorder %s138, %s141
      %p147 = scmp.eq.s32.totalorder %s15, 0
      %p148 = por %p146, %p147
      %p149 = scmp.ne.s32.totalorder %s138, %s141
      %p150 = scmp.eq.s32.totalorder %s20, 7
      %p151 = por %p149, %p150
      %p152 = scmp.ne.s32.totalorder %s141, %s142
      %p153 = scmp.eq.s32.totalorder %s20, 0
      %p154 = por %p152, %p153
      %p155 = scmp.ne.s32.totalorder %s141, %s142
      %p156 = scmp.eq.s32.totalorder %s21, 7
      %p157 = por %p155, %p156
      %p159 = scmp.ne.s32.totalorder %s142, %s158
      %p160 = scmp.eq.s32.totalorder %s21, 0
      %p161 = por %p159, %p160
      %s162 = ssub.s32 %s22, %s34
      %p163 = scmp.eq.s32.totalorder %s162, 0
      %s165 = sadd.s32 %s164, 1
      %s166 = scalar_select %p163, %s164, %s165
      %p169 = pneg %p163
      %p170 = scmp.eq.s32.totalorder %s15, 7
      %p171 = por %p169, %p170
      %p172 = scmp.ne.s32.totalorder %s164, %s167
      %p173 = scmp.eq.s32.totalorder %s15, 0
      %p174 = por %p172, %p173
      %p175 = scmp.ne.s32.totalorder %s164, %s167
      %p176 = scmp.eq.s32.totalorder %s20, 7
      %p177 = por %p175, %p176
      %p178 = scmp.ne.s32.totalorder %s167, %s168
      %p179 = scmp.eq.s32.totalorder %s20, 0
      %p180 = por %p178, %p179
      %p181 = scmp.ne.s32.totalorder %s167, %s168
      %p182 = scmp.eq.s32.totalorder %s21, 7
      %p183 = por %p181, %p182
      %p185 = scmp.ne.s32.totalorder %s168, %s184
      %p186 = scmp.eq.s32.totalorder %s21, 0
      %p187 = por %p185, %p186
      %p188 = scmp.le.s32.totalorder 1, %s15
      %p189 = scmp.lt.s32.totalorder %s15, 9
      %p190 = pnand %p188, %p189
      %p191 = pneg %p190
      // Predicated region
      $region9: #{_lambda_.5} parent=5 // pred_check
        _
      $region10: #{_lambda_.5} parent=5 // pred_check_branch
        %193 = sbr.rel (%p190) target = $region12
      $region11: #{_lambda_.5} parent=5 // pred_region
        %s194 = ssub.s32 %s15, 1
        // Predicated region
        $region13: #{_lambda_.5} parent=11 // pred_check
          %p195 = pneg %p74
        $region14: #{_lambda_.5} parent=11 // pred_check_branch
          %197 = sbr.rel (%p195) target = $region16
        $region15: #{_lambda_.5} parent=11 // pred_region
          _
        $region16: #{_lambda_.5} parent=11 // pred_fallthru
          _
      $region12: #{_lambda_.5} parent=5 // pred_fallthru
        _
      %p198 = scmp.lt.s32.totalorder %s15, 8
      // Predicated region
      $region17: #{_lambda_.5} parent=5 // pred_check
        %p199 = pneg %p198
      $region18: #{_lambda_.5} parent=5 // pred_check_branch
        %201 = sbr.rel (%p199) target = $region20
      $region19: #{_lambda_.5} parent=5 // pred_region
        // Predicated region
        $region21: #{_lambda_.5} parent=19 // pred_check
          %p202 = pneg %p47
        $region22: #{_lambda_.5} parent=19 // pred_check_branch
          %204 = sbr.rel (%p202) target = $region24
        $region23: #{_lambda_.5} parent=19 // pred_region
          %p205 = scmp.lt.s32.totalorder %s22, 3
          %s206 = scalar_select %p205, %s22, 3
          %s207 = smul.addr %s206, 8
          %s208 = scalar_lea.vmem %s0, %s207
        $region24: #{_lambda_.5} parent=19 // pred_fallthru
          _
        // Predicated region
        $region25: #{_lambda_.5} parent=19 // pred_check
          %p209 = pneg %p94
        $region26: #{_lambda_.5} parent=19 // pred_check_branch
          %211 = sbr.rel (%p209) target = $region28
        $region27: #{_lambda_.5} parent=19 // pred_region
          %s212 = sand.u32 %s84, 1
          %s213 = sand.u32 %s84, 1
          %s214 = smul.addr %s213, 32
          %s215 = scalar_lea.vmem [#allocation6], %s214
          %s216 = smul.addr %s23, 4
          %s217 = scalar_lea.vmem %s2, %s216
          // Predicated region
          $region29: #{_lambda_.5} parent=27 // pred_check
            _
          $region30: #{_lambda_.5} parent=27 // pred_check_branch
            %219 = sbr.rel (0) target = $region32
          $region31: #{_lambda_.5} parent=27 // pred_region
            // Predicated region
            $region33: #{_lambda_.5} parent=31 // pred_check
              _
            $region34: #{_lambda_.5} parent=31 // pred_check_branch
              %221 = sbr.rel target = $region36
            $region35: #{_lambda_.5} parent=31 // pred_region
              // Predicated region
              $region48: #{_lambda_.5} parent=35 // pred_check
                _
              $region49: #{_lambda_.5} parent=35 // pred_check_branch
                %251 = sbr.rel (0) target = $region51
              $region50: #{_lambda_.5} parent=35 // pred_region
                loop: start=0, step=1, limit=1
                $region52: #{_lambda_.5} parent=50 // loop_pre_header
                  _
                $region53: #{_lambda_.5} parent=50 // loop_header
                  %s253 = sphi 0, %s257
                  %p254 = scmp.ge.s32.totalorder %s253, 1
                  %s258 = sphi %s217, %s217
                  %s259 = sphi %s215, %s215
                $region54: #{_lambda_.5} parent=50 // loop_header_branch
                  %256 = sbr.rel (%p254) target = $region58
                $region55: #{_lambda_.5} parent=50 // loop_body
                  _
                $region56: #{_lambda_.5} parent=50 // loop_footer
                  %s257 = sadd.s32 1, %s253
                $region57: #{_lambda_.5} parent=50 // loop_footer_branch
                  %252 = sbr.rel target = $region53
                $region58: #{_lambda_.5} parent=50 // loop_exit
                  _
                %s261 = ssub.s32 16, 1
                loop: start=0, step=1, limit=1
                $region59: #{_lambda_.5} parent=50 // loop_pre_header
                  _
                $region60: #{_lambda_.5} parent=50 // loop_header
                  %s263 = sphi 0, %s267
                  %p264 = scmp.ge.s32.totalorder %s263, 1
                  %s268 = sphi %s217, %s217
                  %s269 = sphi %s215, %s215
                $region61: #{_lambda_.5} parent=50 // loop_header_branch
                  %266 = sbr.rel (%p264) target = $region65
                $region62: #{_lambda_.5} parent=50 // loop_body
                  %v270 = vld [vmem:[%s268] sm:%s261]
                  %271 = vst [vmem:[%s269] sm:%s261] %v270
                  %v272 = vld [vmem:[%s268 + $0x8] sm:%s261]
                  %273 = vst [vmem:[%s269 + $0x4] sm:%s261] %v272
                  %v274 = vld [vmem:[%s268 + $0x10] sm:%s261]
                  %275 = vst [vmem:[%s269 + $0x8] sm:%s261] %v274
                  %v276 = vld [vmem:[%s268 + $0x18] sm:%s261]
                  %277 = vst [vmem:[%s269 + $0xc] sm:%s261] %v276
                  %v278 = vld [vmem:[%s268 + $0x20] sm:%s261]
                  %279 = vst [vmem:[%s269 + $0x10] sm:%s261] %v278
                  %v280 = vld [vmem:[%s268 + $0x28] sm:%s261]
                  %281 = vst [vmem:[%s269 + $0x14] sm:%s261] %v280
                  %v282 = vld [vmem:[%s268 + $0x30] sm:%s261]
                  %283 = vst [vmem:[%s269 + $0x18] sm:%s261] %v282
                  %v284 = vld [vmem:[%s268 + $0x38] sm:%s261]
                  %285 = vst [vmem:[%s269 + $0x1c] sm:%s261] %v284
                $region63: #{_lambda_.5} parent=50 // loop_footer
                  %s267 = sadd.s32 1, %s263
                $region64: #{_lambda_.5} parent=50 // loop_footer_branch
                  %262 = sbr.rel target = $region60
                $region65: #{_lambda_.5} parent=50 // loop_exit
                  _
              $region51: #{_lambda_.5} parent=35 // pred_fallthru
                _
            $region36: #{_lambda_.5} parent=31 // pred_fallthru
              _
            // Predicated region
            $region37: #{_lambda_.5} parent=31 // pred_check
              _
            $region38: #{_lambda_.5} parent=31 // pred_check_branch
              %223 = sbr.rel (0) target = $region40
            $region39: #{_lambda_.5} parent=31 // pred_region
              %s225 = ssub.s32 16, 1
              loop: start=0, step=1, limit=1
              $region41: #{_lambda_.5} parent=39 // loop_pre_header
                _
              $region42: #{_lambda_.5} parent=39 // loop_header
                %s227 = sphi 0, %s231
                %p228 = scmp.ge.s32.totalorder %s227, 1
                %s232 = sphi %s217, %s217
                %s233 = sphi %s215, %s215
              $region43: #{_lambda_.5} parent=39 // loop_header_branch
                %230 = sbr.rel (%p228) target = $region47
              $region44: #{_lambda_.5} parent=39 // loop_body
                %v234 = vld [vmem:[%s232] sm:%s225]
                %235 = vst [vmem:[%s233] sm:%s225] %v234
                %v236 = vld [vmem:[%s232 + $0x8] sm:%s225]
                %237 = vst [vmem:[%s233 + $0x4] sm:%s225] %v236
                %v238 = vld [vmem:[%s232 + $0x10] sm:%s225]
                %239 = vst [vmem:[%s233 + $0x8] sm:%s225] %v238
                %v240 = vld [vmem:[%s232 + $0x18] sm:%s225]
                %241 = vst [vmem:[%s233 + $0xc] sm:%s225] %v240
                %v242 = vld [vmem:[%s232 + $0x20] sm:%s225]
                %243 = vst [vmem:[%s233 + $0x10] sm:%s225] %v242
                %v244 = vld [vmem:[%s232 + $0x28] sm:%s225]
                %245 = vst [vmem:[%s233 + $0x14] sm:%s225] %v244
                %v246 = vld [vmem:[%s232 + $0x30] sm:%s225]
                %247 = vst [vmem:[%s233 + $0x18] sm:%s225] %v246
                %v248 = vld [vmem:[%s232 + $0x38] sm:%s225]
                %249 = vst [vmem:[%s233 + $0x1c] sm:%s225] %v248
              $region45: #{_lambda_.5} parent=39 // loop_footer
                %s231 = sadd.s32 1, %s227
              $region46: #{_lambda_.5} parent=39 // loop_footer_branch
                %226 = sbr.rel target = $region42
              $region47: #{_lambda_.5} parent=39 // loop_exit
                _
            $region40: #{_lambda_.5} parent=31 // pred_fallthru
              _
          $region32: #{_lambda_.5} parent=27 // pred_fallthru
            _
          %286 = vnop
        $region28: #{_lambda_.5} parent=19 // pred_fallthru
          _
        // Predicated region
        $region66: #{_lambda_.5} parent=19 // pred_check
          %p287 = pneg %p120
        $region67: #{_lambda_.5} parent=19 // pred_check_branch
          %289 = sbr.rel (%p287) target = $region69
        $region68: #{_lambda_.5} parent=19 // pred_region
          %p290 = scmp.lt.s32.totalorder %s22, 3
          %s291 = scalar_select %p290, %s22, 3
          %s292 = smul.addr %s291, 8
          %s293 = scalar_lea.vmem %s3, %s292
        $region69: #{_lambda_.5} parent=19 // pred_fallthru
          _
      $region20: #{_lambda_.5} parent=5 // pred_fallthru
        _
      %p294 = scmp.le.s32.totalorder 1, %s15
      %p295 = scmp.lt.s32.totalorder %s15, 9
      %p296 = pnand %p294, %p295
      %p297 = pneg %p296
      // Predicated region
      $region70: #{_lambda_.5} parent=5 // pred_check
        _
      $region71: #{_lambda_.5} parent=5 // pred_check_branch
        %299 = sbr.rel (%p296) target = $region73
      $region72: #{_lambda_.5} parent=5 // pred_region
        %s300 = ssub.s32 %s15, 1
        %s301 = sand.u32 %s87, 1
        %s302 = sand.u32 %s87, 1
        %s303 = smul.addr %s302, 32
        %s304 = scalar_lea.vmem [#allocation6], %s303
        // Predicated region
        $region74: #{_lambda_.5} parent=72 // pred_check
          %p305 = pneg %p100
        $region75: #{_lambda_.5} parent=72 // pred_check_branch
          %307 = sbr.rel (%p305) target = $region77
        $region76: #{_lambda_.5} parent=72 // pred_region
          _
        $region77: #{_lambda_.5} parent=72 // pred_fallthru
          _
        %p308 = scmp.lt.s32.totalorder %s24, 3
        %s309 = scalar_select %p308, %s24, 3
        %s310 = smul.addr %s309, 8
        %s311 = scalar_lea.vmem %s0, %s310
        %p312 = pneg %p53
        %p313 = pneg %p50
        %p314 = pneg %p74
        %p315 = pneg %p71
        %s316 = sand.u32 %s87, 1
        %s317 = sand.u32 %s87, 1
        %s318 = smul.addr %s317, 32
        %s319 = scalar_lea.vmem [#allocation6], %s318
        %p320 = pneg %p100
        %p321 = pneg %p97
        %p322 = scmp.lt.s32.totalorder %s24, 3
        %s323 = scalar_select %p322, %s24, 3
        %s324 = smul.addr %s323, 8
        %s325 = scalar_lea.vmem %s3, %s324
        %p326 = pneg %p126
        %p327 = pneg %p123
        %p328 = pneg %p154
        %p329 = pneg %p151
        %s330 = sand.u32 %s141, 1
        %s331 = scalar_lea.sflag [#allocation8], %s330
        %s332 = sand.u32 %s141, 1
        %s333 = smul.addr %s332, 8
        %s334 = scalar_lea.vmem [#allocation7], %s333
        %p335 = pneg %p180
        %p336 = pneg %p177
        %p337 = scmp.lt.s32.totalorder %s24, 3
        %s338 = scalar_select %p337, %s24, 3
        %s339 = smul.addr %s338, 8
        %s340 = scalar_lea.vmem %s5, %s339
        %p341 = scmp.lt.s32.totalorder %s24, 3
        %s342 = scalar_select %p341, %s24, 3
        %s343 = smul.addr %s342, 8
        %s344 = scalar_lea.vmem %s0, %s343
        %p345 = scmp.lt.s32.totalorder %s24, 3
        %s346 = scalar_select %p345, %s24, 3
        %s347 = smul.addr %s346, 8
        %s348 = scalar_lea.vmem %s3, %s347
        %p349 = scmp.lt.s32.totalorder %s24, 3
        %s350 = scalar_select %p349, %s24, 3
        %s351 = smul.addr %s350, 8
        %s352 = scalar_lea.vmem %s5, %s351
        %p354 = scmp.eq.s32.totalorder %s25, 0
        // Predicated region
        $region78: #{_lambda_.5} parent=72 // pred_check
          %p355 = pneg %p354
        $region79: #{_lambda_.5} parent=72 // pred_check_branch
          %357 = sbr.rel (%p355) target = $region81
        $region80: #{_lambda_.5} parent=72 // pred_region
          %v358 = vld [vmem:[%s344] sm:$0xff]
          %v359 = vld [vmem:[%s1] sm:$0x1]
          %vm360 = vcmask 523264
          %v361 = vsel %vm360, %v358, 0.0
          %362 = vadd.xlane.f32.xlu0 %v361
          %v363 = vpop.xlane.xlu0 %362
          %v364 = vrcp.pop 64.0
          %v365 = vmul.f32 64.0, %v364
          %v366 = vsub.f32 1.0, %v365
          %v367 = vmul.f32 %v364, %v366
          %v368 = vadd.f32 %v364, %v367
          %vm369 = vweird.f32 %v364
          %v370 = vsel %vm369, %v364, %v368
          %v371 = vmul.f32 %v363, %v370
          %v372 = vsub.f32 %v358, %v371
          %v373 = vmul.f32 %v372, %v372
          %v374 = vsel %vm360, %v373, 0.0
          %375 = vadd.xlane.f32.xlu0 %v374
          %v376 = vpop.xlane.xlu0 %375
          %v377 = vmul.f32 %v376, %v370
          %v378 = vadd.f32 %v377, 1e-05
          %v379 = vrsqrt.pop %v378
          %v380 = vmul.f32 %v379, %v378
          %v381 = vmul.f32 %v380, %v379
          %v382 = vmul.f32 0.5, %v381
          %v383 = vsub.f32 1.5, %v382
          %v384 = vmul.f32 %v379, %v383
          %vm385 = vweird.f32 %v378
          %vm386 = vweird.f32 %v379
          %vm387 = vmor %vm385, %vm386
          %v388 = vsel %vm387, %v379, %v384
          %v389 = vmul.f32 %v372, %v388
          %v391 = vperm.slane %v359, 0
          %v393 = vmul.f32 %v389, %v391
          %v394 = vpack.c.bf16 %v393, %v393
          %vm395 = vcmask 519168
          %396 = vst.msk [vmem:[#allocation2] sm:$0xf] %vm395, %v394
          %vm397 = vcmask 7168
          %398 = vst.msk [vmem:[#allocation3] sm:$0xff] %vm397, -1e+30
          %399 = vst.msk [vmem:[#allocation4] sm:$0xff] %vm397, 0.0
          %400 = vst.msk [vmem:[#allocation5] sm:$0xff] %vm397, 0.0
        $region81: #{_lambda_.5} parent=72 // pred_fallthru
          _
        %v401 = vld [vmem:[#allocation2] sm:$0xf]
        %v402 = vld [vmem:[%s304] sm:$0xf]
        %v403 = vld [vmem:[%s304 + $0x4] sm:$0xf]
        %v404 = vld [vmem:[%s304 + $0x8] sm:$0xf]
        %v405 = vld [vmem:[%s304 + $0xc] sm:$0xf]
        %v406 = vld [vmem:[%s304 + $0x10] sm:$0xf]
        %v407 = vld [vmem:[%s304 + $0x14] sm:$0xf]
        %v408 = vld [vmem:[%s304 + $0x18] sm:$0xf]
        %v409 = vld [vmem:[%s304 + $0x1c] sm:$0xf]
        %v418 = vunpack.c.l.b16 %v402
        %v419 = vunpack.c.l.b16 %v403
        %v420 = vunpack.c.l.b16 %v404
        %v421 = vunpack.c.l.b16 %v405
        %v422 = vunpack.c.l.b16 %v406
        %v423 = vunpack.c.l.b16 %v407
        %v424 = vunpack.c.l.b16 %v408
        %v425 = vunpack.c.l.b16 %v409
        %v426 = vpack.c.b16 %v419, %v418
        %v427 = vpack.c.b16 %v421, %v420
        %v428 = vpack.c.b16 %v423, %v422
        %v429 = vpack.c.b16 %v425, %v424
        %vm434 = vcmask 523264
        %v436 = vsel %vm434, %v401, 0
        %438 = vmatpush.bf16.msra.mxu0 0
        %439 = vmatpush.bf16.msra.mxu0 0
        %440 = vmatpush.bf16.msra.mxu0 0
        %441 = vmatpush.bf16.msra.mxu0 0
        %442 = vmatpush.bf16.msra.mxu0 %v429
        %443 = vmatpush.bf16.msra.mxu0 %v428
        %444 = vmatpush.bf16.msra.mxu0 %v427
        %445 = vmatpush.bf16.msra.mxu0 %v426
        %446 = vmatmul.bf16.gmra.mxu0 %v436
        %v447 = vpop.f32.mrf.mxu0
        %v448 = vadd.f32 0.0, %v447
        %v449 = vpop.f32.mrf.mxu0
        %450 = vdwg.mxu0
        %451 = vst [vmem:[%s334] sm:$0xff] %v448
        %v452 = vld [vmem:[%s348] sm:$0xff]
        %v453 = vld [vmem:[#allocation3] sm:$0xff]
        %454 = vmax.xlane.f32.xlu0 %v448
        %v455 = vpop.xlane.xlu0 %454
        %v456 = vmax.f32 %v453, %v455
        %v457 = vld [vmem:[#allocation4] sm:$0xff]
        %v458 = vsub.f32 %v453, %v456
        %v459 = vmul.f32 %v458, 1.442695
        %v460 = vpow.pop %v459
        %v461 = vmul.f32 %v457, %v460
        %463 = vset.pattern.permute.xlu0 0
        %464 = vperm.xlu0 %463, %v456
        %v465 = vpop.permute.xlu0 %464
        %v467 = vsub.f32 %v448, %v465
        %v468 = vmul.f32 %v467, 1.442695
        %v469 = vpow.pop %v468
        %470 = vadd.xlane.f32.xlu0 %v469
        %v471 = vpop.xlane.xlu0 %470
        %v472 = vadd.f32 %v461, %v471
        %vm473 = vcmask 7168
        %474 = vst.msk [vmem:[#allocation4] sm:$0xff] %vm473, %v472
        %475 = vst.msk [vmem:[#allocation3] sm:$0xff] %vm473, %v456
        %v476 = vlaneseq
        %v477 = vand.u32 %v476, 127
        %s478 = smul.u32 %s25, 128
        %v479 = vstv %s478
        %v480 = vadd.s32 %v477, %v479
        %v481 = vld [vmem:[#allocation5] sm:$0xff]
        %482 = vset.pattern.permute.xlu0 0
        %483 = vperm.xlu0 %482, %v452
        %v484 = vpop.permute.xlu0 %483
        %vm485 = vcmp.eq.s32.totalorder %v480, %v484
        %v486 = vsel %vm485, %v448, 0.0
        %487 = vadd.xlane.f32.xlu0 %v486
        %v488 = vpop.xlane.xlu0 %487
        %v489 = vadd.f32 %v481, %v488
        %490 = vst.msk [vmem:[#allocation5] sm:$0xff] %vm473, %v489
        %p491 = scmp.eq.s32.totalorder %s25, 1
        // Predicated region
        $region82: #{_lambda_.5} parent=72 // pred_check
          %p492 = pneg %p491
        $region83: #{_lambda_.5} parent=72 // pred_check_branch
          %494 = sbr.rel (%p492) target = $region85
        $region84: #{_lambda_.5} parent=72 // pred_region
          %v495 = vld [vmem:[#allocation3] sm:$0xff]
          %v496 = vld [vmem:[#allocation4] sm:$0xff]
          %v497 = vlog2.pop %v496
          %v498 = vmul.f32 %v497, 0.6931472
          %v499 = vadd.f32 %v495, %v498
          %vm500 = vcmp.ne.s32.totalorder %v452, 0
          %v501 = vsel %vm500, 1, 0
          %v502 = vcvt.s32.f32 %v501
          %v503 = vld [vmem:[#allocation5] sm:$0xff]
          %v504 = vsub.f32 %v499, %v503
          %v505 = vmul.f32 %v504, %v502
          %506 = vst.msk [vmem:[%s352] sm:$0xff] %vm473, %v505
        $region85: #{_lambda_.5} parent=72 // pred_fallthru
          _
        %s507 = sand.u32 %s141, 1
        %s508 = scalar_lea.sflag [#allocation8], %s507
        %s509 = sand.u32 %s141, 1
        %s510 = smul.addr %s509, 8
        %s511 = scalar_lea.vmem [#allocation7], %s510
        %p512 = scmp.lt.s32.totalorder %s24, 3
        %s513 = scalar_select %p512, %s24, 3
        %s514 = smul.addr %s513, 8
        %s515 = scalar_lea.vmem %s5, %s514
        // Predicated region
        $region86: #{_lambda_.5} parent=72 // pred_check
          %p516 = pneg %p151
        $region87: #{_lambda_.5} parent=72 // pred_check_branch
          %518 = sbr.rel (%p516) target = $region89
        $region88: #{_lambda_.5} parent=72 // pred_region
          %520 = vsyncadd %s508, 0
          %s521 = smul.addr %s24, 2
          %s522 = sadd.s32 %s25, %s521
          %s523 = smul.addr %s522, 8
          %s524 = scalar_lea.hbm %s4, %s523
          %s526 = sshll.u32 %s511, 4
          %s527 = int_to_ptr.vmem [resolvable:$true] %s526
          %s528 = sshll.u32 %s524, 4
          %s529 = int_to_ptr.hbm [resolvable:$true] %s528
          %531 = dma.vmem_to_hbm [thread:$0]  %s527, 128, %s529, %s508
        $region89: #{_lambda_.5} parent=72 // pred_fallthru
          _
        // Predicated region
        $region90: #{_lambda_.5} parent=72 // pred_check
          %p532 = pneg %p177
        $region91: #{_lambda_.5} parent=72 // pred_check_branch
          %534 = sbr.rel (%p532) target = $region93
        $region92: #{_lambda_.5} parent=72 // pred_region
          _
        $region93: #{_lambda_.5} parent=72 // pred_fallthru
          _
      $region73: #{_lambda_.5} parent=5 // pred_fallthru
        _
      %p535 = scmp.le.s32.totalorder 2, %s15
      // Predicated region
      $region94: #{_lambda_.5} parent=5 // pred_check
        %p536 = pneg %p535
      $region95: #{_lambda_.5} parent=5 // pred_check_branch
        %538 = sbr.rel (%p536) target = $region97
      $region96: #{_lambda_.5} parent=5 // pred_region
        %s539 = ssub.s32 %s15, 2
        // Predicated region
        $region98: #{_lambda_.5} parent=96 // pred_check
          %p540 = pneg %p157
        $region99: #{_lambda_.5} parent=96 // pred_check_branch
          %542 = sbr.rel (%p540) target = $region101
        $region100: #{_lambda_.5} parent=96 // pred_region
          %s543 = sand.u32 %s142, 1
          %s544 = scalar_lea.sflag [#allocation8], %s543
          %s545 = sand.u32 %s142, 1
          %s546 = smul.addr %s545, 8
          %s547 = scalar_lea.vmem [#allocation7], %s546
          %549 = dma.done %s544, 128
        $region101: #{_lambda_.5} parent=96 // pred_fallthru
          _
        // Predicated region
        $region102: #{_lambda_.5} parent=96 // pred_check
          %p550 = pneg %p183
        $region103: #{_lambda_.5} parent=96 // pred_check_branch
          %552 = sbr.rel (%p550) target = $region105
        $region104: #{_lambda_.5} parent=96 // pred_region
          %p553 = scmp.lt.s32.totalorder %s26, 3
          %s554 = scalar_select %p553, %s26, 3
          %s555 = smul.addr %s554, 8
          %s556 = scalar_lea.vmem %s5, %s555
        $region105: #{_lambda_.5} parent=96 // pred_fallthru
          _
      $region97: #{_lambda_.5} parent=5 // pred_fallthru
        _
    $region6: #{_lambda_.5} parent=1 // loop_footer
      %s19 = sadd.s32 1, %s15
    $region7: #{_lambda_.5} parent=1 // loop_footer_branch
      %14 = sbr.rel target = $region3
    $region8: #{_lambda_.5} parent=1 // loop_exit
      _
    %557 = vsyncpa [#allocation8], 1
    %s558 = scalar_lea.sflag [#allocation8], 1
    %559 = vsyncpa %s558, 1

// kernel: _lambda_.3
$region0: #{_lambda_.3}
  #allocation0 [shape = 'u32[]', space=smem, size = 0x4, offset = 0x4, fixed_abs, tag = 'smem constant byte address 0x4 - core index']
  #allocation1 [shape = 'u32[72,128]{1,0:T(1,128)}', space=vmem, size = 0x9000, scoped, tag = 'internal scratch']
  %s0 = inlined_call_operand.vmem [shape: f32[2,16,64], index: 0, kind: input, shape index: {}]
  %s1 = inlined_call_operand.vmem [shape: f32[1,64], index: 1, kind: input, shape index: {}]
  %s2 = inlined_call_operand.vmem [shape: bf16[64,192], index: 2, kind: input, shape index: {}]
  %s3 = inlined_call_operand.vmem [shape: bf16[64,64], index: 3, kind: input, shape index: {}]
  %s4 = inlined_call_operand.vmem [shape: f32[1,64], index: 4, kind: input, shape index: {}]
  %s5 = inlined_call_operand.vmem [shape: bf16[64,256], index: 5, kind: input, shape index: {}]
  %s6 = inlined_call_operand.vmem [shape: bf16[256,64], index: 6, kind: input, shape index: {}]
  %s7 = inlined_call_operand.vmem [shape: f32[2,16,64], index: 7, kind: output, shape index: {}]
  %s8 = sld [smem:[#allocation0]]
  $region61: #{_lambda_.3} parent=0
    _
  %s10 = ssub.s32 1, %s8
  %s11 = scalar_select 0, %s10, %s8
  loop: start=0, step=1, limit=4
  $region2: #{_lambda_.3} parent=0 // loop_pre_header
    _
  $region3: #{_lambda_.3} parent=0 // loop_header
    %s13 = sphi 0, %s17
    %p14 = scmp.ge.s32.totalorder %s13, 4
    %s23 = sphi 0, %s25
    %s26 = sphi 0, %s23
    %s27 = sphi 0, %s26
    %s43 = sphi 0, %s27
    %s47 = sphi 0, %s47
    %s49 = sphi 0, %s47
    %s50 = sphi 0, %s49
    %s64 = sphi 0, %s50
    %s68 = sphi 0, %s68
    %s70 = sphi 0, %s68
    %s71 = sphi 0, %s70
    %s85 = sphi 0, %s71
    %s89 = sphi 0, %s89
    %s91 = sphi 0, %s89
    %s92 = sphi 0, %s91
    %s106 = sphi 0, %s92
    %s110 = sphi 0, %s110
    %s112 = sphi 0, %s110
    %s113 = sphi 0, %s112
    %s127 = sphi 0, %s113
    %s131 = sphi 0, %s131
    %s133 = sphi 0, %s131
    %s134 = sphi 0, %s133
    %s148 = sphi 0, %s134
    %s152 = sphi 0, %s152
    %s154 = sphi 0, %s152
    %s155 = sphi 0, %s154
    %s169 = sphi 0, %s155
    %s175 = sphi 0, %s177
    %s178 = sphi 0, %s175
    %s179 = sphi 0, %s178
    %s195 = sphi 0, %s179
  $region4: #{_lambda_.3} parent=0 // loop_header_branch
    %16 = sbr.rel (%p14) target = $region8
  $region5: #{_lambda_.3} parent=0 // loop_body
    %s18 = ssub.s32 %s13, 1
    %s19 = ssub.s32 %s13, 2
    %s20 = sadd.s32 %s13, 1
    %s21 = ssub.s32 %s13, %s20
    %p22 = scmp.eq.s32.totalorder %s21, 0
    %s24 = sadd.s32 %s23, 1
    %s25 = scalar_select %p22, %s23, %s24
    %p28 = pneg %p22
    %p29 = scmp.eq.s32.totalorder %s13, 1
    %p30 = por %p28, %p29
    %p31 = scmp.ne.s32.totalorder %s23, %s26
    %p32 = scmp.eq.s32.totalorder %s13, 0
    %p33 = por %p31, %p32
    %p34 = scmp.ne.s32.totalorder %s23, %s26
    %p35 = scmp.eq.s32.totalorder %s18, 1
    %p36 = por %p34, %p35
    %p37 = scmp.ne.s32.totalorder %s26, %s27
    %p38 = scmp.eq.s32.totalorder %s18, 0
    %p39 = por %p37, %p38
    %p40 = scmp.ne.s32.totalorder %s26, %s27
    %p41 = scmp.eq.s32.totalorder %s19, 1
    %p42 = por %p40, %p41
    %p44 = scmp.ne.s32.totalorder %s27, %s43
    %p45 = scmp.eq.s32.totalorder %s19, 0
    %p46 = por %p44, %p45
    %s48 = sadd.s32 %s47, 1
    %p51 = scmp.eq.s32.totalorder %s13, 1
    %p52 = scmp.ne.s32.totalorder %s47, %s49
    %p53 = scmp.eq.s32.totalorder %s13, 0
    %p54 = por %p52, %p53
    %p55 = scmp.ne.s32.totalorder %s47, %s49
    %p56 = scmp.eq.s32.totalorder %s18, 1
    %p57 = por %p55, %p56
    %p58 = scmp.ne.s32.totalorder %s49, %s50
    %p59 = scmp.eq.s32.totalorder %s18, 0
    %p60 = por %p58, %p59
    %p61 = scmp.ne.s32.totalorder %s49, %s50
    %p62 = scmp.eq.s32.totalorder %s19, 1
    %p63 = por %p61, %p62
    %p65 = scmp.ne.s32.totalorder %s50, %s64
    %p66 = scmp.eq.s32.totalorder %s19, 0
    %p67 = por %p65, %p66
    %s69 = sadd.s32 %s68, 1
    %p72 = scmp.eq.s32.totalorder %s13, 1
    %p73 = scmp.ne.s32.totalorder %s68, %s70
    %p74 = scmp.eq.s32.totalorder %s13, 0
    %p75 = por %p73, %p74
    %p76 = scmp.ne.s32.totalorder %s68, %s70
    %p77 = scmp.eq.s32.totalorder %s18, 1
    %p78 = por %p76, %p77
    %p79 = scmp.ne.s32.totalorder %s70, %s71
    %p80 = scmp.eq.s32.totalorder %s18, 0
    %p81 = por %p79, %p80
    %p82 = scmp.ne.s32.totalorder %s70, %s71
    %p83 = scmp.eq.s32.totalorder %s19, 1
    %p84 = por %p82, %p83
    %p86 = scmp.ne.s32.totalorder %s71, %s85
    %p87 = scmp.eq.s32.totalorder %s19, 0
    %p88 = por %p86, %p87
    %s90 = sadd.s32 %s89, 1
    %p93 = scmp.eq.s32.totalorder %s13, 1
    %p94 = scmp.ne.s32.totalorder %s89, %s91
    %p95 = scmp.eq.s32.totalorder %s13, 0
    %p96 = por %p94, %p95
    %p97 = scmp.ne.s32.totalorder %s89, %s91
    %p98 = scmp.eq.s32.totalorder %s18, 1
    %p99 = por %p97, %p98
    %p100 = scmp.ne.s32.totalorder %s91, %s92
    %p101 = scmp.eq.s32.totalorder %s18, 0
    %p102 = por %p100, %p101
    %p103 = scmp.ne.s32.totalorder %s91, %s92
    %p104 = scmp.eq.s32.totalorder %s19, 1
    %p105 = por %p103, %p104
    %p107 = scmp.ne.s32.totalorder %s92, %s106
    %p108 = scmp.eq.s32.totalorder %s19, 0
    %p109 = por %p107, %p108
    %s111 = sadd.s32 %s110, 1
    %p114 = scmp.eq.s32.totalorder %s13, 1
    %p115 = scmp.ne.s32.totalorder %s110, %s112
    %p116 = scmp.eq.s32.totalorder %s13, 0
    %p117 = por %p115, %p116
    %p118 = scmp.ne.s32.totalorder %s110, %s112
    %p119 = scmp.eq.s32.totalorder %s18, 1
    %p120 = por %p118, %p119
    %p121 = scmp.ne.s32.totalorder %s112, %s113
    %p122 = scmp.eq.s32.totalorder %s18, 0
    %p123 = por %p121, %p122
    %p124 = scmp.ne.s32.totalorder %s112, %s113
    %p125 = scmp.eq.s32.totalorder %s19, 1
    %p126 = por %p124, %p125
    %p128 = scmp.ne.s32.totalorder %s113, %s127
    %p129 = scmp.eq.s32.totalorder %s19, 0
    %p130 = por %p128, %p129
    %s132 = sadd.s32 %s131, 1
    %p135 = scmp.eq.s32.totalorder %s13, 1
    %p136 = scmp.ne.s32.totalorder %s131, %s133
    %p137 = scmp.eq.s32.totalorder %s13, 0
    %p138 = por %p136, %p137
    %p139 = scmp.ne.s32.totalorder %s131, %s133
    %p140 = scmp.eq.s32.totalorder %s18, 1
    %p141 = por %p139, %p140
    %p142 = scmp.ne.s32.totalorder %s133, %s134
    %p143 = scmp.eq.s32.totalorder %s18, 0
    %p144 = por %p142, %p143
    %p145 = scmp.ne.s32.totalorder %s133, %s134
    %p146 = scmp.eq.s32.totalorder %s19, 1
    %p147 = por %p145, %p146
    %p149 = scmp.ne.s32.totalorder %s134, %s148
    %p150 = scmp.eq.s32.totalorder %s19, 0
    %p151 = por %p149, %p150
    %s153 = sadd.s32 %s152, 1
    %p156 = scmp.eq.s32.totalorder %s13, 1
    %p157 = scmp.ne.s32.totalorder %s152, %s154
    %p158 = scmp.eq.s32.totalorder %s13, 0
    %p159 = por %p157, %p158
    %p160 = scmp.ne.s32.totalorder %s152, %s154
    %p161 = scmp.eq.s32.totalorder %s18, 1
    %p162 = por %p160, %p161
    %p163 = scmp.ne.s32.totalorder %s154, %s155
    %p164 = scmp.eq.s32.totalorder %s18, 0
    %p165 = por %p163, %p164
    %p166 = scmp.ne.s32.totalorder %s154, %s155
    %p167 = scmp.eq.s32.totalorder %s19, 1
    %p168 = por %p166, %p167
    %p170 = scmp.ne.s32.totalorder %s155, %s169
    %p171 = scmp.eq.s32.totalorder %s19, 0
    %p172 = por %p170, %p171
    %s173 = ssub.s32 %s13, %s20
    %p174 = scmp.eq.s32.totalorder %s173, 0
    %s176 = sadd.s32 %s175, 1
    %s177 = scalar_select %p174, %s175, %s176
    %p180 = pneg %p174
    %p181 = scmp.eq.s32.totalorder %s13, 1
    %p182 = por %p180, %p181
    %p183 = scmp.ne.s32.totalorder %s175, %s178
    %p184 = scmp.eq.s32.totalorder %s13, 0
    %p185 = por %p183, %p184
    %p186 = scmp.ne.s32.totalorder %s175, %s178
    %p187 = scmp.eq.s32.totalorder %s18, 1
    %p188 = por %p186, %p187
    %p189 = scmp.ne.s32.totalorder %s178, %s179
    %p190 = scmp.eq.s32.totalorder %s18, 0
    %p191 = por %p189, %p190
    %p192 = scmp.ne.s32.totalorder %s178, %s179
    %p193 = scmp.eq.s32.totalorder %s19, 1
    %p194 = por %p192, %p193
    %p196 = scmp.ne.s32.totalorder %s179, %s195
    %p197 = scmp.eq.s32.totalorder %s19, 0
    %p198 = por %p196, %p197
    %p199 = scmp.le.s32.totalorder 1, %s13
    %p200 = scmp.lt.s32.totalorder %s13, 3
    %p201 = pnand %p199, %p200
    %p202 = pneg %p201
    // Predicated region
    $region9: #{_lambda_.3} parent=5 // pred_check
      _
    $region10: #{_lambda_.3} parent=5 // pred_check_branch
      %204 = sbr.rel (%p201) target = $region12
    $region11: #{_lambda_.3} parent=5 // pred_region
      %s205 = ssub.s32 %s13, 1
      // Predicated region
      $region13: #{_lambda_.3} parent=11 // pred_check
        %p206 = pneg %p60
      $region14: #{_lambda_.3} parent=11 // pred_check_branch
        %208 = sbr.rel (%p206) target = $region16
      $region15: #{_lambda_.3} parent=11 // pred_region
        _
      $region16: #{_lambda_.3} parent=11 // pred_fallthru
        _
      // Predicated region
      $region17: #{_lambda_.3} parent=11 // pred_check
        %p209 = pneg %p81
      $region18: #{_lambda_.3} parent=11 // pred_check_branch
        %211 = sbr.rel (%p209) target = $region20
      $region19: #{_lambda_.3} parent=11 // pred_region
        _
      $region20: #{_lambda_.3} parent=11 // pred_fallthru
        _
      // Predicated region
      $region21: #{_lambda_.3} parent=11 // pred_check
        %p212 = pneg %p102
      $region22: #{_lambda_.3} parent=11 // pred_check_branch
        %214 = sbr.rel (%p212) target = $region24
      $region23: #{_lambda_.3} parent=11 // pred_region
        _
      $region24: #{_lambda_.3} parent=11 // pred_fallthru
        _
      // Predicated region
      $region25: #{_lambda_.3} parent=11 // pred_check
        %p215 = pneg %p123
      $region26: #{_lambda_.3} parent=11 // pred_check_branch
        %217 = sbr.rel (%p215) target = $region28
      $region27: #{_lambda_.3} parent=11 // pred_region
        _
      $region28: #{_lambda_.3} parent=11 // pred_fallthru
        _
      // Predicated region
      $region29: #{_lambda_.3} parent=11 // pred_check
        %p218 = pneg %p144
      $region30: #{_lambda_.3} parent=11 // pred_check_branch
        %220 = sbr.rel (%p218) target = $region32
      $region31: #{_lambda_.3} parent=11 // pred_region
        _
      $region32: #{_lambda_.3} parent=11 // pred_fallthru
        _
      // Predicated region
      $region33: #{_lambda_.3} parent=11 // pred_check
        %p221 = pneg %p165
      $region34: #{_lambda_.3} parent=11 // pred_check_branch
        %223 = sbr.rel (%p221) target = $region36
      $region35: #{_lambda_.3} parent=11 // pred_region
        _
      $region36: #{_lambda_.3} parent=11 // pred_fallthru
        _
    $region12: #{_lambda_.3} parent=5 // pred_fallthru
      _
    %p224 = scmp.lt.s32.totalorder %s13, 2
    // Predicated region
    $region37: #{_lambda_.3} parent=5 // pred_check
      %p225 = pneg %p224
    $region38: #{_lambda_.3} parent=5 // pred_check_branch
      %227 = sbr.rel (%p225) target = $region40
    $region39: #{_lambda_.3} parent=5 // pred_region
      // Predicated region
      $region41: #{_lambda_.3} parent=39 // pred_check
        %p228 = pneg %p33
      $region42: #{_lambda_.3} parent=39 // pred_check_branch
        %230 = sbr.rel (%p228) target = $region44
      $region43: #{_lambda_.3} parent=39 // pred_region
        %p231 = scmp.lt.s32.totalorder %s13, 1
        %s232 = scalar_select %p231, %s13, 1
        %s233 = smul.addr %s232, 2
        %s234 = smul.addr %s233, 8
        %s235 = scalar_lea.vmem %s0, %s234
      $region44: #{_lambda_.3} parent=39 // pred_fallthru
        _
    $region40: #{_lambda_.3} parent=5 // pred_fallthru
      _
    %p236 = scmp.le.s32.totalorder 1, %s13
    %p237 = scmp.lt.s32.totalorder %s13, 3
    %p238 = pnand %p236, %p237
    %p239 = pneg %p238
    // Predicated region
    $region45: #{_lambda_.3} parent=5 // pred_check
      _
    $region46: #{_lambda_.3} parent=5 // pred_check_branch
      %241 = sbr.rel (%p238) target = $region48
    $region47: #{_lambda_.3} parent=5 // pred_region
      %s242 = ssub.s32 %s13, 1
      %p243 = scmp.lt.s32.totalorder %s18, 1
      %s244 = scalar_select %p243, %s18, 1
      %s245 = smul.addr %s244, 2
      %s246 = smul.addr %s245, 8
      %s247 = scalar_lea.vmem %s0, %s246
      %p248 = pneg %p39
      %p249 = pneg %p36
      %p250 = pneg %p60
      %p251 = pneg %p57
      %p252 = pneg %p81
      %p253 = pneg %p78
      %p254 = pneg %p102
      %p255 = pneg %p99
      %p256 = pneg %p123
      %p257 = pneg %p120
      %p258 = pneg %p144
      %p259 = pneg %p141
      %p260 = pneg %p165
      %p261 = pneg %p162
      %p262 = pneg %p191
      %p263 = pneg %p188
      %p264 = scmp.lt.s32.totalorder %s18, 1
      %s265 = scalar_select %p264, %s18, 1
      %s266 = smul.addr %s265, 2
      %s267 = smul.addr %s266, 8
      %s268 = scalar_lea.vmem %s7, %s267
      %p269 = scmp.lt.s32.totalorder %s18, 1
      %s270 = scalar_select %p269, %s18, 1
      %s271 = smul.addr %s270, 2
      %s272 = smul.addr %s271, 8
      %s273 = scalar_lea.vmem %s0, %s272
      %p274 = scmp.lt.s32.totalorder %s18, 1
      %s275 = scalar_select %p274, %s18, 1
      %s276 = smul.addr %s275, 2
      %s277 = smul.addr %s276, 8
      %s278 = scalar_lea.vmem %s7, %s277
      %v280 = vld [vmem:[%s273] sm:$0xff]
      %v281 = vld [vmem:[%s273 + $0x8] sm:$0xff]
      %v282 = vld [vmem:[%s1] sm:$0x1]
      %vm283 = vcmask 523264
      %v284 = vsel %vm283, %v280, 0.0
      %285 = vadd.xlane.f32.xlu0 %v284
      %v286 = vpop.xlane.xlu0 %285
      %v287 = vsel %vm283, %v281, 0.0
      %288 = vadd.xlane.f32.xlu0 %v287
      %v289 = vpop.xlane.xlu0 %288
      %v290 = vrcp.pop 64.0
      %v291 = vmul.f32 64.0, %v290
      %v292 = vsub.f32 1.0, %v291
      %v293 = vmul.f32 %v290, %v292
      %v294 = vadd.f32 %v290, %v293
      %vm295 = vweird.f32 %v290
      %v296 = vsel %vm295, %v290, %v294
      %v297 = vmul.f32 %v286, %v296
      %v298 = vmul.f32 %v289, %v296
      %v299 = vsub.f32 %v280, %v297
      %v300 = vsub.f32 %v281, %v298
      %v301 = vmul.f32 %v299, %v299
      %v302 = vmul.f32 %v300, %v300
      %v303 = vsel %vm283, %v301, 0.0
      %304 = vadd.xlane.f32.xlu0 %v303
      %v305 = vpop.xlane.xlu0 %304
      %v306 = vsel %vm283, %v302, 0.0
      %307 = vadd.xlane.f32.xlu0 %v306
      %v308 = vpop.xlane.xlu0 %307
      %v309 = vmul.f32 %v305, %v296
      %v310 = vmul.f32 %v308, %v296
      %v311 = vadd.f32 %v309, 1e-05
      %v312 = vadd.f32 %v310, 1e-05
      %v313 = vrsqrt.pop %v311
      %v314 = vmul.f32 %v313, %v311
      %v315 = vmul.f32 %v314, %v313
      %v316 = vmul.f32 0.5, %v315
      %v317 = vsub.f32 1.5, %v316
      %v318 = vmul.f32 %v313, %v317
      %vm319 = vweird.f32 %v311
      %vm320 = vweird.f32 %v313
      %vm321 = vmor %vm319, %vm320
      %v322 = vsel %vm321, %v313, %v318
      %v323 = vrsqrt.pop %v312
      %v324 = vmul.f32 %v323, %v312
      %v325 = vmul.f32 %v324, %v323
      %v326 = vmul.f32 0.5, %v325
      %v327 = vsub.f32 1.5, %v326
      %v328 = vmul.f32 %v323, %v327
      %vm329 = vweird.f32 %v312
      %vm330 = vweird.f32 %v323
      %vm331 = vmor %vm329, %vm330
      %v332 = vsel %vm331, %v323, %v328
      %v333 = vmul.f32 %v299, %v322
      %v334 = vmul.f32 %v300, %v332
      %v336 = vperm.slane %v282, 0
      %v338 = vmul.f32 %v333, %v336
      %v339 = vmul.f32 %v334, %v336
      %v340 = vpack.c.bf16 %v339, %v338
      %v341 = vld [vmem:[%s2] sm:$0xff]
      %v342 = vld [vmem:[%s2 + $0x8] sm:$0xff]
      %v343 = vld [vmem:[%s2 + $0x10] sm:$0xff]
      %v344 = vld [vmem:[%s2 + $0x18] sm:$0xff]
      %v345 = vld [vmem:[%s2 + $0x20] sm:$0xff]
      %v346 = vld [vmem:[%s2 + $0x28] sm:$0xff]
      %v347 = vld [vmem:[%s2 + $0x30] sm:$0xff]
      %v348 = vld [vmem:[%s2 + $0x38] sm:$0xff]
      %v357 = vunpack.c.l.b16 %v341
      %v358 = vunpack.c.h.b16 %v341
      %v359 = vunpack.c.l.b16 %v342
      %v360 = vunpack.c.h.b16 %v342
      %v361 = vunpack.c.l.b16 %v343
      %v362 = vunpack.c.h.b16 %v343
      %v363 = vunpack.c.l.b16 %v344
      %v364 = vunpack.c.h.b16 %v344
      %v365 = vunpack.c.l.b16 %v345
      %v366 = vunpack.c.h.b16 %v345
      %v367 = vunpack.c.l.b16 %v346
      %v368 = vunpack.c.h.b16 %v346
      %v369 = vunpack.c.l.b16 %v347
      %v370 = vunpack.c.h.b16 %v347
      %v371 = vunpack.c.l.b16 %v348
      %v372 = vunpack.c.h.b16 %v348
      %v373 = vpack.c.b16 %v359, %v357
      %v374 = vpack.c.b16 %v360, %v358
      %v375 = vpack.c.b16 %v363, %v361
      %v376 = vpack.c.b16 %v364, %v362
      %v377 = vpack.c.b16 %v367, %v365
      %v378 = vpack.c.b16 %v368, %v366
      %v379 = vpack.c.b16 %v371, %v369
      %v380 = vpack.c.b16 %v372, %v370
      %v390 = vsel %vm283, %v340, 0
      %392 = vmatpush.bf16.msra.mxu0 0
      %393 = vmatpush.bf16.msra.mxu0 0
      %394 = vmatpush.bf16.msra.mxu0 0
      %395 = vmatpush.bf16.msra.mxu0 0
      %396 = vmatpush.bf16.msra.mxu0 %v379
      %397 = vmatpush.bf16.msra.mxu0 %v377
      %398 = vmatpush.bf16.msra.mxu0 %v375
      %399 = vmatpush.bf16.msra.mxu0 %v373
      %400 = vmatmul.bf16.gmra.mxu0 %v390
      %v401 = vpop.f32.mrf.mxu0
      %v402 = vadd.f32 0.0, %v401
      %v403 = vpop.f32.mrf.mxu0
      %v404 = vadd.f32 0.0, %v403
      %405 = vdwg.mxu0
      %406 = vmatpush.bf16.msra.mxu0 0
      %407 = vmatpush.bf16.msra.mxu0 0
      %408 = vmatpush.bf16.msra.mxu0 0
      %409 = vmatpush.bf16.msra.mxu0 0
      %410 = vmatpush.bf16.msra.mxu0 %v380
      %411 = vmatpush.bf16.msra.mxu0 %v378
      %412 = vmatpush.bf16.msra.mxu0 %v376
      %413 = vmatpush.bf16.msra.mxu0 %v374
      %414 = vmatmul.bf16.gmra.mxu0 %v390
      %v415 = vpop.f32.mrf.mxu0
      %v416 = vadd.f32 0.0, %v415
      %v417 = vpop.f32.mrf.mxu0
      %v418 = vadd.f32 0.0, %v417
      %419 = vdwg.mxu0
      %v420 = vlaneseq
      %v421 = vshrl.u32 %v420, 7
      %v422 = vadd.s32 %v421, 8
      %v423 = vlaneseq
      %v424 = vand.u32 %v423, 127
      %vm425 = vcmp.ge.s32.totalorder %v421, %v424
      %vm426 = vcmp.ge.s32.totalorder %v422, %v424
      %v427 = vld [vmem:[%s3] sm:$0xf]
      %v428 = vld [vmem:[%s3 + $0x4] sm:$0xf]
      %v429 = vld [vmem:[%s3 + $0x8] sm:$0xf]
      %v430 = vld [vmem:[%s3 + $0xc] sm:$0xf]
      %v431 = vld [vmem:[%s3 + $0x10] sm:$0xf]
      %v432 = vld [vmem:[%s3 + $0x14] sm:$0xf]
      %v433 = vld [vmem:[%s3 + $0x18] sm:$0xf]
      %v434 = vld [vmem:[%s3 + $0x1c] sm:$0xf]
      %v435 = vpack.c.bf16 %v404, %v402
      %v436 = vpack.c.bf16 %v418, %v416
      %438 = vrot.lane.b32.xlu0 %v435, 64
      %v439 = vpop.permute.xlu0 %438
      %vm440 = vcmask 261120
      %v442 = vsel %vm440, %v435, 0
      %v445 = vsel %vm440, %v439, 0
      %447 = vmatpush.bf16.xpose.msra.mxu0 0
      %448 = vmatpush.bf16.xpose.msra.mxu0 0
      %449 = vmatpush.bf16.xpose.msra.mxu0 0
      %450 = vmatpush.bf16.xpose.msra.mxu0 0
      %451 = vmatpush.bf16.xpose.msra.mxu0 0
      %452 = vmatpush.bf16.xpose.msra.mxu0 0
      %453 = vmatpush.bf16.xpose.msra.mxu0 0
      %454 = vmatpush.bf16.xpose.msra.mxu0 %v445
      %455 = vmatmul.bf16.gmra.mxu0 %v442
      %v456 = vpop.f32.mrf.mxu0
      %v457 = vadd.f32 0.0, %v456
      %v458 = vpop.f32.mrf.mxu0
      %v459 = vadd.f32 0.0, %v458
      %460 = vdwg.mxu0
      %v461 = vmul.f32 %v457, 0.17677669
      %v462 = vmul.f32 %v459, 0.17677669
      %v463 = vsel %vm425, %v461, -1e+30
      %v464 = vsel %vm426, %v462, -1e+30
      %vm465 = vcmask 130048
      %v466 = vsel %vm465, %v463, -inf
      %467 = vmax.xlane.f32.xlu0 %v466
      %v468 = vpop.xlane.xlu0 %467
      %v469 = vsel %vm465, %v464, -inf
      %470 = vmax.xlane.f32.xlu0 %v469
      %v471 = vpop.xlane.xlu0 %470
      %v472 = vsub.f32 %v463, %v468
      %v473 = vsub.f32 %v464, %v471
      %v474 = vmul.f32 %v472, 1.442695
      %v475 = vpow.pop %v474
      %v476 = vmul.f32 %v473, 1.442695
      %v477 = vpow.pop %v476
      %v478 = vsel %vm465, %v475, 0.0
      %479 = vadd.xlane.f32.xlu0 %v478
      %v480 = vpop.xlane.xlu0 %479
      %v481 = vsel %vm465, %v477, 0.0
      %482 = vadd.xlane.f32.xlu0 %v481
      %v483 = vpop.xlane.xlu0 %482
      %v484 = vrcp.pop %v480
      %v485 = vmul.f32 %v480, %v484
      %v486 = vsub.f32 1.0, %v485
      %v487 = vmul.f32 %v484, %v486
      %v488 = vadd.f32 %v484, %v487
      %vm489 = vweird.f32 %v480
      %vm490 = vweird.f32 %v484
      %vm491 = vmor %vm489, %vm490
      %v492 = vsel %vm491, %v484, %v488
      %v493 = vand.u32 2147483647, %v480
      %vm494 = vcmp.eq.f32.partialorder %v493, 8.507059e+37
      %v495 = vand.u32 %v480, 2147483648
      %v496 = vor.u32 1.1754944e-38, %v495
      %v497 = vsel %vm494, %v496, %v492
      %v498 = vmul.f32 %v475, %v497
      %v499 = vrcp.pop %v483
      %v500 = vmul.f32 %v483, %v499
      %v501 = vsub.f32 1.0, %v500
      %v502 = vmul.f32 %v499, %v501
      %v503 = vadd.f32 %v499, %v502
      %vm504 = vweird.f32 %v483
      %vm505 = vweird.f32 %v499
      %vm506 = vmor %vm504, %vm505
      %v507 = vsel %vm506, %v499, %v503
      %v508 = vand.u32 2147483647, %v483
      %vm509 = vcmp.eq.f32.partialorder %v508, 8.507059e+37
      %v510 = vand.u32 %v483, 2147483648
      %v511 = vor.u32 1.1754944e-38, %v510
      %v512 = vsel %vm509, %v511, %v507
      %v513 = vmul.f32 %v477, %v512
      %v514 = vpack.c.bf16 %v513, %v498
      %v516 = vsel %vm465, %v514, 0
      %518 = vmatpush.bf16.msra.mxu0 0
      %519 = vmatpush.bf16.msra.mxu0 0
      %520 = vmatpush.bf16.msra.mxu0 0
      %521 = vmatpush.bf16.msra.mxu0 0
      %522 = vmatpush.bf16.msra.mxu0 0
      %523 = vmatpush.bf16.msra.mxu0 0
      %524 = vmatpush.bf16.msra.mxu0 0
      %525 = vmatpush.bf16.msra.mxu0 %v436
      %526 = vmatmul.bf16.gmra.mxu0 %v516
      %v527 = vpop.f32.mrf.mxu0
      %v528 = vadd.f32 0.0, %v527
      %v529 = vpop.f32.mrf.mxu0
      %v530 = vadd.f32 0.0, %v529
      %531 = vdwg.mxu0
      %v532 = vpack.c.bf16 %v530, %v528
      %533 = vrot.lane.b32.xlu0 %v435, 96
      %v534 = vpop.permute.xlu0 %533
      %535 = vrot.lane.b32.xlu0 %v435, 32
      %v536 = vpop.permute.xlu0 %535
      %v538 = vsel %vm440, %v534, 0
      %v541 = vsel %vm440, %v536, 0
      %543 = vmatpush.bf16.xpose.msra.mxu0 0
      %544 = vmatpush.bf16.xpose.msra.mxu0 0
      %545 = vmatpush.bf16.xpose.msra.mxu0 0
      %546 = vmatpush.bf16.xpose.msra.mxu0 0
      %547 = vmatpush.bf16.xpose.msra.mxu0 0
      %548 = vmatpush.bf16.xpose.msra.mxu0 0
      %549 = vmatpush.bf16.xpose.msra.mxu0 0
      %550 = vmatpush.bf16.xpose.msra.mxu0 %v541
      %551 = vmatmul.bf16.gmra.mxu0 %v538
      %v552 = vpop.f32.mrf.mxu0
      %v553 = vadd.f32 0.0, %v552
      %v554 = vpop.f32.mrf.mxu0
      %v555 = vadd.f32 0.0, %v554
      %556 = vdwg.mxu0
      %v557 = vmul.f32 %v553, 0.17677669
      %v558 = vmul.f32 %v555, 0.17677669
      %v559 = vsel %vm425, %v557, -1e+30
      %v560 = vsel %vm426, %v558, -1e+30
      %v561 = vsel %vm465, %v559, -inf
      %562 = vmax.xlane.f32.xlu0 %v561
      %v563 = vpop.xlane.xlu0 %562
      %v564 = vsel %vm465, %v560, -inf
      %565 = vmax.xlane.f32.xlu0 %v564
      %v566 = vpop.xlane.xlu0 %565
      %v567 = vsub.f32 %v559, %v563
      %v568 = vsub.f32 %v560, %v566
      %v569 = vmul.f32 %v567, 1.442695
      %v570 = vpow.pop %v569
      %v571 = vmul.f32 %v568, 1.442695
      %v572 = vpow.pop %v571
      %v573 = vsel %vm465, %v570, 0.0
      %574 = vadd.xlane.f32.xlu0 %v573
      %v575 = vpop.xlane.xlu0 %574
      %v576 = vsel %vm465, %v572, 0.0
      %577 = vadd.xlane.f32.xlu0 %v576
      %v578 = vpop.xlane.xlu0 %577
      %v579 = vrcp.pop %v575
      %v580 = vmul.f32 %v575, %v579
      %v581 = vsub.f32 1.0, %v580
      %v582 = vmul.f32 %v579, %v581
      %v583 = vadd.f32 %v579, %v582
      %vm584 = vweird.f32 %v575
      %vm585 = vweird.f32 %v579
      %vm586 = vmor %vm584, %vm585
      %v587 = vsel %vm586, %v579, %v583
      %v588 = vand.u32 2147483647, %v575
      %vm589 = vcmp.eq.f32.partialorder %v588, 8.507059e+37
      %v590 = vand.u32 %v575, 2147483648
      %v591 = vor.u32 1.1754944e-38, %v590
      %v592 = vsel %vm589, %v591, %v587
      %v593 = vmul.f32 %v570, %v592
      %v594 = vrcp.pop %v578
      %v595 = vmul.f32 %v578, %v594
      %v596 = vsub.f32 1.0, %v595
      %v597 = vmul.f32 %v594, %v596
      %v598 = vadd.f32 %v594, %v597
      %vm599 = vweird.f32 %v578
      %vm600 = vweird.f32 %v594
      %vm601 = vmor %vm599, %vm600
      %v602 = vsel %vm601, %v594, %v598
      %v603 = vand.u32 2147483647, %v578
      %vm604 = vcmp.eq.f32.partialorder %v603, 8.507059e+37
      %v605 = vand.u32 %v578, 2147483648
      %v606 = vor.u32 1.1754944e-38, %v605
      %v607 = vsel %vm604, %v606, %v602
      %v608 = vmul.f32 %v572, %v607
      %v609 = vpack.c.bf16 %v608, %v593
      %611 = vrot.lane.b32.xlu0 %v436, 96
      %v612 = vpop.permute.xlu0 %611
      %v615 = vsel %vm465, %v609, 0
      %617 = vmatpush.bf16.msra.mxu0 0
      %618 = vmatpush.bf16.msra.mxu0 0
      %619 = vmatpush.bf16.msra.mxu0 0
      %620 = vmatpush.bf16.msra.mxu0 0
      %621 = vmatpush.bf16.msra.mxu0 0
      %622 = vmatpush.bf16.msra.mxu0 0
      %623 = vmatpush.bf16.msra.mxu0 0
      %624 = vmatpush.bf16.msra.mxu0 %v612
      %625 = vmatmul.bf16.gmra.mxu0 %v615
      %v626 = vpop.f32.mrf.mxu0
      %v627 = vadd.f32 0.0, %v626
      %v628 = vpop.f32.mrf.mxu0
      %v629 = vadd.f32 0.0, %v628
      %630 = vdwg.mxu0
      %v631 = vpack.c.bf16 %v629, %v627
      %v636 = vunpack.c.l.b16 %v431
      %v637 = vunpack.c.l.b16 %v432
      %v638 = vunpack.c.l.b16 %v433
      %v639 = vunpack.c.l.b16 %v434
      %v640 = vpack.c.b16 %v637, %v636
      %v641 = vpack.c.b16 %v639, %v638
      %v645 = vsel %vm440, %v631, 0
      %647 = vmatpush.bf16.msra.mxu0 0
      %648 = vmatpush.bf16.msra.mxu0 0
      %649 = vmatpush.bf16.msra.mxu0 0
      %650 = vmatpush.bf16.msra.mxu0 0
      %651 = vmatpush.bf16.msra.mxu0 0
      %652 = vmatpush.bf16.msra.mxu0 0
      %653 = vmatpush.bf16.msra.mxu0 %v641
      %654 = vmatpush.bf16.msra.mxu0 %v640
      %655 = vmatmul.bf16.gmra.mxu0 %v645
      %v656 = vpop.f32.mrf.mxu0
      %v657 = vadd.f32 0.0, %v656
      %v658 = vpop.f32.mrf.mxu0
      %v659 = vadd.f32 0.0, %v658
      %660 = vdwg.mxu0
      %v665 = vunpack.c.l.b16 %v427
      %v666 = vunpack.c.l.b16 %v428
      %v667 = vunpack.c.l.b16 %v429
      %v668 = vunpack.c.l.b16 %v430
      %v669 = vpack.c.b16 %v666, %v665
      %v670 = vpack.c.b16 %v668, %v667
      %v674 = vsel %vm440, %v532, 0
      %676 = vmatpush.bf16.msra.mxu0 0
      %677 = vmatpush.bf16.msra.mxu0 0
      %678 = vmatpush.bf16.msra.mxu0 0
      %679 = vmatpush.bf16.msra.mxu0 0
      %680 = vmatpush.bf16.msra.mxu0 0
      %681 = vmatpush.bf16.msra.mxu0 0
      %682 = vmatpush.bf16.msra.mxu0 %v670
      %683 = vmatpush.bf16.msra.mxu0 %v669
      %684 = vmatmul.bf16.gmra.mxu0 %v674
      %v685 = vpop.f32.mrf.mxu0
      %v686 = vadd.f32 %v657, %v685
      %v687 = vpop.f32.mrf.mxu0
      %v688 = vadd.f32 %v659, %v687
      %689 = vdwg.mxu0
      %v690 = vadd.f32 %v280, %v686
      %v691 = vadd.f32 %v281, %v688
      %v692 = vld [vmem:[%s4] sm:$0x1]
      %v693 = vsel %vm283, %v690, 0.0
      %694 = vadd.xlane.f32.xlu0 %v693
      %v695 = vpop.xlane.xlu0 %694
      %v696 = vsel %vm283, %v691, 0.0
      %697 = vadd.xlane.f32.xlu0 %v696
      %v698 = vpop.xlane.xlu0 %697
      %v699 = vmul.f32 %v695, %v296
      %v700 = vmul.f32 %v698, %v296
      %v701 = vsub.f32 %v690, %v699
      %v702 = vsub.f32 %v691, %v700
      %v703 = vmul.f32 %v701, %v701
      %v704 = vmul.f32 %v702, %v702
      %v705 = vsel %vm283, %v703, 0.0
      %706 = vadd.xlane.f32.xlu0 %v705
      %v707 = vpop.xlane.xlu0 %706
      %v708 = vsel %vm283, %v704, 0.0
      %709 = vadd.xlane.f32.xlu0 %v708
      %v710 = vpop.xlane.xlu0 %709
      %v711 = vmul.f32 %v707, %v296
      %v712 = vmul.f32 %v710, %v296
      %v713 = vadd.f32 %v711, 1e-05
      %v714 = vadd.f32 %v712, 1e-05
      %v715 = vrsqrt.pop %v713
      %v716 = vmul.f32 %v715, %v713
      %v717 = vmul.f32 %v716, %v715
      %v718 = vmul.f32 0.5, %v717
      %v719 = vsub.f32 1.5, %v718
      %v720 = vmul.f32 %v715, %v719
      %vm721 = vweird.f32 %v713
      %vm722 = vweird.f32 %v715
      %vm723 = vmor %vm721, %vm722
      %v724 = vsel %vm723, %v715, %v720
      %v725 = vrsqrt.pop %v714
      %v726 = vmul.f32 %v725, %v714
      %v727 = vmul.f32 %v726, %v725
      %v728 = vmul.f32 0.5, %v727
      %v729 = vsub.f32 1.5, %v728
      %v730 = vmul.f32 %v725, %v729
      %vm731 = vweird.f32 %v714
      %vm732 = vweird.f32 %v725
      %vm733 = vmor %vm731, %vm732
      %v734 = vsel %vm733, %v725, %v730
      %v735 = vmul.f32 %v701, %v724
      %v736 = vmul.f32 %v702, %v734
      %v738 = vperm.slane %v692, 0
      %v740 = vmul.f32 %v735, %v738
      %v741 = vmul.f32 %v736, %v738
      %v742 = vpack.c.bf16 %v741, %v740
      %v743 = vld [vmem:[%s5] sm:$0xff]
      %v744 = vld [vmem:[%s5 + $0x8] sm:$0xff]
      %v745 = vld [vmem:[%s5 + $0x10] sm:$0xff]
      %v746 = vld [vmem:[%s5 + $0x18] sm:$0xff]
      %v747 = vld [vmem:[%s5 + $0x20] sm:$0xff]
      %v748 = vld [vmem:[%s5 + $0x28] sm:$0xff]
      %v749 = vld [vmem:[%s5 + $0x30] sm:$0xff]
      %v750 = vld [vmem:[%s5 + $0x38] sm:$0xff]
      %v759 = vunpack.c.l.b16 %v743
      %v760 = vunpack.c.h.b16 %v743
      %v761 = vunpack.c.l.b16 %v744
      %v762 = vunpack.c.h.b16 %v744
      %v763 = vunpack.c.l.b16 %v745
      %v764 = vunpack.c.h.b16 %v745
      %v765 = vunpack.c.l.b16 %v746
      %v766 = vunpack.c.h.b16 %v746
      %v767 = vunpack.c.l.b16 %v747
      %v768 = vunpack.c.h.b16 %v747
      %v769 = vunpack.c.l.b16 %v748
      %v770 = vunpack.c.h.b16 %v748
      %v771 = vunpack.c.l.b16 %v749
      %v772 = vunpack.c.h.b16 %v749
      %v773 = vunpack.c.l.b16 %v750
      %v774 = vunpack.c.h.b16 %v750
      %v775 = vpack.c.b16 %v761, %v759
      %v776 = vpack.c.b16 %v762, %v760
      %v777 = vpack.c.b16 %v765, %v763
      %v778 = vpack.c.b16 %v766, %v764
      %v779 = vpack.c.b16 %v769, %v767
      %v780 = vpack.c.b16 %v770, %v768
      %v781 = vpack.c.b16 %v773, %v771
      %v782 = vpack.c.b16 %v774, %v772
      %v792 = vsel %vm283, %v742, 0
      %794 = vmatpush.bf16.msra.mxu0 0
      %795 = vmatpush.bf16.msra.mxu0 0
      %796 = vmatpush.bf16.msra.mxu0 0
      %797 = vmatpush.bf16.msra.mxu0 0
      %798 = vmatpush.bf16.msra.mxu0 %v781
      %799 = vmatpush.bf16.msra.mxu0 %v779
      %800 = vmatpush.bf16.msra.mxu0 %v777
      %801 = vmatpush.bf16.msra.mxu0 %v775
      %802 = vmatmul.bf16.gmra.mxu0 %v792
      %v803 = vpop.f32.mrf.mxu0
      %v804 = vadd.f32 0.0, %v803
      %v805 = vpop.f32.mrf.mxu0
      %v806 = vadd.f32 0.0, %v805
      %807 = vdwg.mxu0
      %808 = vmatpush.bf16.msra.mxu0 0
      %809 = vmatpush.bf16.msra.mxu0 0
      %810 = vmatpush.bf16.msra.mxu0 0
      %811 = vmatpush.bf16.msra.mxu0 0
      %812 = vmatpush.bf16.msra.mxu0 %v782
      %813 = vmatpush.bf16.msra.mxu0 %v780
      %814 = vmatpush.bf16.msra.mxu0 %v778
      %815 = vmatpush.bf16.msra.mxu0 %v776
      %816 = vmatmul.bf16.gmra.mxu0 %v792
      %v817 = vpop.f32.mrf.mxu0
      %v818 = vadd.f32 0.0, %v817
      %v819 = vpop.f32.mrf.mxu0
      %v820 = vadd.f32 0.0, %v819
      %821 = vdwg.mxu0
      %v822 = vmul.f32 %v804, 0.5
      %v823 = vmul.f32 %v818, 0.5
      %v824 = vmul.f32 %v806, 0.5
      %v825 = vmul.f32 %v820, 0.5
      %v826 = vmul.f32 %v804, 0.044715
      %v827 = vmul.f32 %v818, 0.044715
      %v828 = vmul.f32 %v806, 0.044715
      %v829 = vmul.f32 %v820, 0.044715
      %v830 = vmul.f32 %v826, %v804
      %v831 = vmul.f32 %v827, %v818
      %v832 = vmul.f32 %v828, %v806
      %v833 = vmul.f32 %v829, %v820
      %v834 = vmul.f32 %v830, %v804
      %v835 = vmul.f32 %v831, %v818
      %v836 = vmul.f32 %v832, %v806
      %v837 = vmul.f32 %v833, %v820
      %v838 = vadd.f32 %v804, %v834
      %v839 = vadd.f32 %v818, %v835
      %v840 = vadd.f32 %v806, %v836
      %v841 = vadd.f32 %v820, %v837
      %v842 = vmul.f32 %v838, 0.7978846
      %v843 = vmul.f32 %v839, 0.7978846
      %v844 = vmul.f32 %v840, 0.7978846
      %v845 = vmul.f32 %v841, 0.7978846
      %v846 = vtanh.pop %v842
      %v847 = vtanh.pop %v843
      %v848 = vtanh.pop %v844
      %v849 = vtanh.pop %v845
      %v850 = vadd.f32 %v846, 1.0
      %v851 = vadd.f32 %v847, 1.0
      %v852 = vadd.f32 %v848, 1.0
      %v853 = vadd.f32 %v849, 1.0
      %v854 = vmul.f32 %v822, %v850
      %v855 = vmul.f32 %v823, %v851
      %v856 = vmul.f32 %v824, %v852
      %v857 = vmul.f32 %v825, %v853
      %v858 = vpack.c.bf16 %v856, %v854
      %v859 = vpack.c.bf16 %v857, %v855
      %v860 = vld [vmem:[%s6] sm:$0xf]
      %v861 = vld [vmem:[%s6 + $0x4] sm:$0xf]
      %v862 = vld [vmem:[%s6 + $0x8] sm:$0xf]
      %v863 = vld [vmem:[%s6 + $0xc] sm:$0xf]
      %v864 = vld [vmem:[%s6 + $0x10] sm:$0xf]
      %v865 = vld [vmem:[%s6 + $0x14] sm:$0xf]
      %v866 = vld [vmem:[%s6 + $0x18] sm:$0xf]
      %v867 = vld [vmem:[%s6 + $0x1c] sm:$0xf]
      %v868 = vld [vmem:[%s6 + $0x20] sm:$0xf]
      %v869 = vld [vmem:[%s6 + $0x24] sm:$0xf]
      %v870 = vld [vmem:[%s6 + $0x28] sm:$0xf]
      %v871 = vld [vmem:[%s6 + $0x2c] sm:$0xf]
      %v872 = vld [vmem:[%s6 + $0x30] sm:$0xf]
      %v873 = vld [vmem:[%s6 + $0x34] sm:$0xf]
      %v874 = vld [vmem:[%s6 + $0x38] sm:$0xf]
      %v875 = vld [vmem:[%s6 + $0x3c] sm:$0xf]
      %v876 = vld [vmem:[%s6 + $0x40] sm:$0xf]
      %v877 = vld [vmem:[%s6 + $0x44] sm:$0xf]
      %v878 = vld [vmem:[%s6 + $0x48] sm:$0xf]
      %v879 = vld [vmem:[%s6 + $0x4c] sm:$0xf]
      %v880 = vld [vmem:[%s6 + $0x50] sm:$0xf]
      %v881 = vld [vmem:[%s6 + $0x54] sm:$0xf]
      %v882 = vld [vmem:[%s6 + $0x58] sm:$0xf]
      %v883 = vld [vmem:[%s6 + $0x5c] sm:$0xf]
      %v884 = vld [vmem:[%s6 + $0x60] sm:$0xf]
      %v885 = vld [vmem:[%s6 + $0x64] sm:$0xf]
      %v886 = vld [vmem:[%s6 + $0x68] sm:$0xf]
      %v887 = vld [vmem:[%s6 + $0x6c] sm:$0xf]
      %v888 = vld [vmem:[%s6 + $0x70] sm:$0xf]
      %v889 = vld [vmem:[%s6 + $0x74] sm:$0xf]
      %v890 = vld [vmem:[%s6 + $0x78] sm:$0xf]
      %v891 = vld [vmem:[%s6 + $0x7c] sm:$0xf]
      %v924 = vunpack.c.l.b16 %v860
      %v925 = vunpack.c.l.b16 %v861
      %v926 = vunpack.c.l.b16 %v862
      %v927 = vunpack.c.l.b16 %v863
      %v928 = vunpack.c.l.b16 %v864
      %v929 = vunpack.c.l.b16 %v865
      %v930 = vunpack.c.l.b16 %v866
      %v931 = vunpack.c.l.b16 %v867
      %v932 = vunpack.c.l.b16 %v868
      %v933 = vunpack.c.l.b16 %v869
      %v934 = vunpack.c.l.b16 %v870
      %v935 = vunpack.c.l.b16 %v871
      %v936 = vunpack.c.l.b16 %v872
      %v937 = vunpack.c.l.b16 %v873
      %v938 = vunpack.c.l.b16 %v874
      %v939 = vunpack.c.l.b16 %v875
      %v940 = vunpack.c.l.b16 %v876
      %v941 = vunpack.c.l.b16 %v877
      %v942 = vunpack.c.l.b16 %v878
      %v943 = vunpack.c.l.b16 %v879
      %v944 = vunpack.c.l.b16 %v880
      %v945 = vunpack.c.l.b16 %v881
      %v946 = vunpack.c.l.b16 %v882
      %v947 = vunpack.c.l.b16 %v883
      %v948 = vunpack.c.l.b16 %v884
      %v949 = vunpack.c.l.b16 %v885
      %v950 = vunpack.c.l.b16 %v886
      %v951 = vunpack.c.l.b16 %v887
      %v952 = vunpack.c.l.b16 %v888
      %v953 = vunpack.c.l.b16 %v889
      %v954 = vunpack.c.l.b16 %v890
      %v955 = vunpack.c.l.b16 %v891
      %v956 = vpack.c.b16 %v925, %v924
      %v957 = vpack.c.b16 %v927, %v926
      %v958 = vpack.c.b16 %v929, %v928
      %v959 = vpack.c.b16 %v931, %v930
      %v960 = vpack.c.b16 %v933, %v932
      %v961 = vpack.c.b16 %v935, %v934
      %v962 = vpack.c.b16 %v937, %v936
      %v963 = vpack.c.b16 %v939, %v938
      %v964 = vpack.c.b16 %v941, %v940
      %v965 = vpack.c.b16 %v943, %v942
      %v966 = vpack.c.b16 %v945, %v944
      %v967 = vpack.c.b16 %v947, %v946
      %v968 = vpack.c.b16 %v949, %v948
      %v969 = vpack.c.b16 %v951, %v950
      %v970 = vpack.c.b16 %v953, %v952
      %v971 = vpack.c.b16 %v955, %v954
      %988 = vmatpush.bf16.msra.mxu0 %v963
      %989 = vmatpush.bf16.msra.mxu0 %v962
      %990 = vmatpush.bf16.msra.mxu0 %v961
      %991 = vmatpush.bf16.msra.mxu0 %v960
      %992 = vmatpush.bf16.msra.mxu0 %v959
      %993 = vmatpush.bf16.msra.mxu0 %v958
      %994 = vmatpush.bf16.msra.mxu0 %v957
      %995 = vmatpush.bf16.msra.mxu0 %v956
      %996 = vmatmul.bf16.gmra.mxu0 %v858
      %v997 = vpop.f32.mrf.mxu0
      %v998 = vadd.f32 0.0, %v997
      %v999 = vpop.f32.mrf.mxu0
      %v1000 = vadd.f32 0.0, %v999
      %1001 = vdwg.mxu0
      %1002 = vmatpush.bf16.msra.mxu0 %v971
      %1003 = vmatpush.bf16.msra.mxu0 %v970
      %1004 = vmatpush.bf16.msra.mxu0 %v969
      %1005 = vmatpush.bf16.msra.mxu0 %v968
      %1006 = vmatpush.bf16.msra.mxu0 %v967
      %1007 = vmatpush.bf16.msra.mxu0 %v966
      %1008 = vmatpush.bf16.msra.mxu0 %v965
      %1009 = vmatpush.bf16.msra.mxu0 %v964
      %1010 = vmatmul.bf16.gmra.mxu0 %v859
      %v1011 = vpop.f32.mrf.mxu0
      %v1012 = vadd.f32 %v998, %v1011
      %v1013 = vpop.f32.mrf.mxu0
      %v1014 = vadd.f32 %v1000, %v1013
      %1015 = vdwg.mxu0
      %v1016 = vadd.f32 %v690, %v1012
      %v1017 = vadd.f32 %v691, %v1014
      %1018 = vst.msk [vmem:[%s278] sm:$0xff] %vm283, %v1016
      %1019 = vst.msk [vmem:[%s278 + $0x8] sm:$0xff] %vm283, %v1017
      %p1020 = scmp.lt.s32.totalorder %s18, 1
      %s1021 = scalar_select %p1020, %s18, 1
      %s1022 = smul.addr %s1021, 2
      %s1023 = smul.addr %s1022, 8
      %s1024 = scalar_lea.vmem %s7, %s1023
      // Predicated region
      $region49: #{_lambda_.3} parent=47 // pred_check
        %p1025 = pneg %p188
      $region50: #{_lambda_.3} parent=47 // pred_check_branch
        %1027 = sbr.rel (%p1025) target = $region52
      $region51: #{_lambda_.3} parent=47 // pred_region
        _
      $region52: #{_lambda_.3} parent=47 // pred_fallthru
        _
    $region48: #{_lambda_.3} parent=5 // pred_fallthru
      _
    %p1028 = scmp.le.s32.totalorder 2, %s13
    // Predicated region
    $region53: #{_lambda_.3} parent=5 // pred_check
      %p1029 = pneg %p1028
    $region54: #{_lambda_.3} parent=5 // pred_check_branch
      %1031 = sbr.rel (%p1029) target = $region56
    $region55: #{_lambda_.3} parent=5 // pred_region
      %s1032 = ssub.s32 %s13, 2
      // Predicated region
      $region57: #{_lambda_.3} parent=55 // pred_check
        %p1033 = pneg %p194
      $region58: #{_lambda_.3} parent=55 // pred_check_branch
        %1035 = sbr.rel (%p1033) target = $region60
      $region59: #{_lambda_.3} parent=55 // pred_region
        %p1036 = scmp.lt.s32.totalorder %s19, 1
        %s1037 = scalar_select %p1036, %s19, 1
        %s1038 = smul.addr %s1037, 2
        %s1039 = smul.addr %s1038, 8
        %s1040 = scalar_lea.vmem %s7, %s1039
      $region60: #{_lambda_.3} parent=55 // pred_fallthru
        _
    $region56: #{_lambda_.3} parent=5 // pred_fallthru
      _
  $region6: #{_lambda_.3} parent=0 // loop_footer
    %s17 = sadd.s32 1, %s13
  $region7: #{_lambda_.3} parent=0 // loop_footer_branch
    %12 = sbr.rel target = $region3
  $region8: #{_lambda_.3} parent=0 // loop_exit
    _

</llo_original>
